<compile_context>
chip_gen: v5e
topology: v5e:2x2
jax: 0.10.0
libtpu: 0.0.40
codegen_flags: <defaults>
</compile_context>

<pallas_src>
import functools

import numpy as np
import jax
import jax.numpy as jnp
from jax.experimental import pallas as pl
from jax.experimental.pallas import tpu as pltpu


P = 128  # padded hidden-channel width = one f32 vreg lane tile


def _round_up(x, m):
    return ((x + m - 1) // m) * m


# ----------------------------------------------------------------------------
# Fused Pallas kernel: 6x GCNConv (+LeakyReLU) + Linear + Tanh + *0.1
# One grid step == one batch element (grid axis marked "parallel").
# ----------------------------------------------------------------------------
def deform_gcn_kernel(x_in_ref, g_ref, a_ref, w0_ref, w0g_ref, w_rest_ref,
                      b_all_ref, wdT_ref, bd_ref, o_ref, *, matmul_dtype):
    f32 = jnp.float32
    md = matmul_dtype

    def mm(a, b):
        # MXU matmul; operands in `matmul_dtype` (bf16 on v6e/v7x), f32 acc.
        return jnp.dot(a.astype(md), b.astype(md), preferred_element_type=f32)

    a_hat = a_ref[...].astype(md)                 # (N, N), cast once, reused 7x
    x_in = x_in_ref[0]                            # (N, C_in_pad) f32

    # ---- layer 0: concat([verts, local, global]) @ W0, concat fused --------
    xw = mm(x_in, w0_ref[...])                    # (N, P)  vertex+local part
    gproj = mm(g_ref[0], w0g_ref[...])            # (1, P)  global part
    xw = xw + gproj                               # broadcast over vertices (VPU)
    x = jnp.dot(a_hat, xw.astype(md),
                preferred_element_type=f32) + b_all_ref[0]          # (N, P)

    # ---- layers 1..5: A_hat @ (X @ W) + b, LeakyReLU after odd layers ------
    for i in range(1, 6):                         # static unroll
        xw = mm(x, w_rest_ref[i - 1])
        x = jnp.dot(a_hat, xw.astype(md),
                    preferred_element_type=f32) + b_all_ref[i]
        if i % 2 == 1:                            # nn.LeakyReLU(), slope 0.01
            x = jnp.where(x >= 0, x, 0.01 * x)    # f32 elementwise (v5e VPU)

    # ---- decoder: Linear(N*3, N*3) + Tanh, then * 0.1 ----------------------
    # dec[m] = sum_{n,c} x[n,c] * Wd[3n+c, m]; computed transposed so every
    # term is a standard MXU matmul:  dec^T = sum_c WdT_c @ x[:, c].
    decT = bd_ref[...]                            # (M_pad, 1) f32
    for c in range(3):
        decT = decT + jnp.dot(wdT_ref[c].astype(md), x[:, c:c + 1].astype(md),
                              preferred_element_type=f32)
    o_ref[0] = (jnp.tanh(decT) * 0.1).astype(o_ref.dtype)


# ----------------------------------------------------------------------------
# One-time weight packing (hoisted OUT of the per-call path)
# ----------------------------------------------------------------------------
def prepack_params(params, *, n_dim, local_dim, global_dim, v_num):
    N = v_num
    M = N * 3
    M_pad = _round_up(M, 128)
    C_in = n_dim + local_dim
    C_in_pad = _round_up(C_in, 128)
    G_pad = _round_up(global_dim, 128)

    enc = params["encoder"]
    w0, _ = enc[0]
    assert w0.shape[0] == C_in + global_dim
    c_out0 = w0.shape[1]
    assert max(w.shape[1] for (w, _) in enc) <= P

    # Split W0 by input block so the [verts|local|global] concat never
    # materializes a global-feature-repeated tensor; zero-pad to lane-dense.
    w0_vl = jnp.zeros((C_in_pad, P), jnp.float32).at[:C_in, :c_out0].set(w0[:C_in])
    w0_g = jnp.zeros((G_pad, P), jnp.float32).at[:global_dim, :c_out0].set(w0[C_in:])

    w_rest = jnp.stack([
        jnp.pad(w, ((0, P - w.shape[0]), (0, P - w.shape[1])))
        for (w, _) in enc[1:]])                                   # (5, P, P)
    b_all = jnp.stack([
        jnp.pad(b, (0, P - b.shape[0]))[None, :] for (_, b) in enc])  # (6, 1, P)

    wd, bd = params["decoder"]
    wd3 = wd.reshape(N, 3, M)                     # Wd[3n+c, m] -> wd3[n, c, m]
    wdT = jnp.stack([
        jnp.pad(wd3[:, c, :], ((0, 0), (0, M_pad - M))).T         # (M_pad, N)
        for c in range(3)])                                       # (3, M_pad, N)
    bd_col = jnp.pad(bd, (0, M_pad - M)).reshape(M_pad, 1)        # (M_pad, 1)

    return {"w0": w0_vl, "w0g": w0_g, "w_rest": w_rest, "b_all": b_all,
            "wdT": wdT, "bd": bd_col}


# ----------------------------------------------------------------------------
# Forward wrapper: cheap input padding + ONE pallas_call over grid=(B,)
# ----------------------------------------------------------------------------
@functools.partial(jax.jit, static_argnames=("matmul_dtype",))
def deform_gcn_forward(batch_vertices, local_features, global_features,
                       a_hat, packed, *, matmul_dtype=jnp.float32):
    B, N, n_dim = batch_vertices.shape
    assert N % 8 == 0
    M = N * 3

    C_in_pad = packed["w0"].shape[0]
    G_pad = packed["w0g"].shape[0]
    M_pad = packed["wdT"].shape[1]

    # Lane-dense inputs: concat [verts | local] and zero-pad channel dims.
    x_in = jnp.concatenate([batch_vertices, local_features], axis=-1)
    x_in = jnp.pad(x_in, ((0, 0), (0, 0), (0, C_in_pad - x_in.shape[-1])))
    g3 = jnp.pad(global_features,
                 ((0, 0), (0, G_pad - global_features.shape[-1])))[:, None, :]

    kernel = functools.partial(deform_gcn_kernel, matmul_dtype=matmul_dtype)

    out = pl.pallas_call(
        kernel,
        out_shape=jax.ShapeDtypeStruct((B, M_pad, 1), jnp.float32),
        grid_spec=pltpu.PrefetchScalarGridSpec(
            num_scalar_prefetch=0,
            grid=(B,),
            in_specs=[
                pl.BlockSpec((1, N, C_in_pad), lambda b: (b, 0, 0)),   # x_in
                pl.BlockSpec((1, 1, G_pad), lambda b: (b, 0, 0)),      # global
                pl.BlockSpec((N, N), lambda b: (0, 0)),                # A_hat
                pl.BlockSpec((C_in_pad, P), lambda b: (0, 0)),         # W0 v+l
                pl.BlockSpec((G_pad, P), lambda b: (0, 0)),            # W0 glob
                pl.BlockSpec((5, P, P), lambda b: (0, 0, 0)),          # W1..W5
                pl.BlockSpec((6, 1, P), lambda b: (0, 0, 0)),          # biases
                pl.BlockSpec((3, M_pad, N), lambda b: (0, 0, 0)),      # Wd^T
                pl.BlockSpec((M_pad, 1), lambda b: (0, 0)),            # bd
            ],
            out_specs=pl.BlockSpec((1, M_pad, 1), lambda b: (b, 0, 0)),
        ),
        compiler_params=pltpu.CompilerParams(
            dimension_semantics=("parallel",),        # batches independent
            vmem_limit_bytes=32 * 1024 * 1024),
    )(x_in, g3, a_hat, packed["w0"], packed["w0g"], packed["w_rest"],
      packed["b_all"], packed["wdT"], packed["bd"])

    return out[:, :M, 0].reshape(B, N, 3)


# ----------------------------------------------------------------------------
# Pure-JAX reference for correctness check
# ----------------------------------------------------------------------------
def deform_gcn_reference(batch_vertices, local_features, global_features,
                         a_hat, params):
    B, N, _ = batch_vertices.shape
    gfeat = jnp.broadcast_to(global_features[:, None, :],
                             (B, N, global_features.shape[-1]))
    x = jnp.concatenate([batch_vertices, local_features, gfeat], axis=2)
    hi = jax.lax.Precision.HIGHEST
    for i, (w, b) in enumerate(params["encoder"]):
        xw = jnp.einsum("bnc,cd->bnd", x, w, precision=hi)
        x = jnp.einsum("nm,bmd->bnd", a_hat, xw, precision=hi) + b
        if i % 2:
            x = jnp.where(x >= 0, x, 0.01 * x)
    f = x.reshape(B, -1)
    wd, bd = params["decoder"]
    out = jnp.tanh(jnp.einsum("bm,mk->bk", f, wd, precision=hi) + bd) * 0.1
    return out.reshape(B, -1, 3)


# ----------------------------------------------------------------------------
# Mesh / edge helpers (preprocessing == glue, done in numpy)
# ----------------------------------------------------------------------------
def make_grid_faces(rows, cols):
    faces = []
    for r in range(rows - 1):
        for c in range(cols - 1):
            v0 = r * cols + c
            v1 = v0 + 1
            v2 = v0 + cols
            v3 = v2 + 1
            faces.append([v0, v1, v2])
            faces.append([v1, v3, v2])
    return np.asarray(faces, dtype=np.int32)


def build_a_hat(faces, n):
    """DeformGCN.get_edges + GCNConv symmetric normalization, densified."""
    e = np.concatenate([faces[:, 0:2], faces[:, 1:3], faces[:, [2, 0]]], axis=0)
    e = np.sort(e, axis=1)
    e = np.unique(e, axis=0)                      # unique undirected edges
    A = np.zeros((n, n), dtype=np.float32)
    A[e[:, 0], e[:, 1]] = 1.0
    A[e[:, 1], e[:, 0]] = 1.0                     # bidirectional
    A = A + np.eye(n, dtype=np.float32)           # self loops
    d_inv_sqrt = 1.0 / np.sqrt(A.sum(axis=1))
    return (d_inv_sqrt[:, None] * A) * d_inv_sqrt[None, :]


# ----------------------------------------------------------------------------
# Main
# ----------------------------------------------------------------------------
if __name__ == "__main__":
    key = jax.random.PRNGKey(0)

    # Small shapes consistent with the module structure.
    B = 2                 # batch of meshes
    rows, cols = 8, 8
    N = rows * cols       # v_num = 64 vertices
    n_dim = 3
    local_dim = 24        # stands in for the 960-d perceptual features
    global_dim = 8        # stands in for the 512-d global features
    in_dim = n_dim + local_dim + global_dim

    # Encoder channel plan mirrors [512,512,256,256,64,3], scaled down.
    enc_dims = [in_dim, 32, 32, 16, 16, 8, 3]

    faces = make_grid_faces(rows, cols)           # (98, 3)
    a_hat = jnp.asarray(build_a_hat(faces, N))    # (N, N) float32

    # Deterministic synthetic parameters.
    keys = jax.random.split(key, 32)
    kit = iter(keys)
    encoder_params = []
    for cin, cout in zip(enc_dims[:-1], enc_dims[1:]):
        w = 0.05 * jax.random.normal(next(kit), (cin, cout), dtype=jnp.float32)
        b = 0.01 * jax.random.normal(next(kit), (cout,), dtype=jnp.float32)
        encoder_params.append((w, b))
    M = N * 3
    wd = 0.02 * jax.random.normal(next(kit), (M, M), dtype=jnp.float32)
    bd = 0.01 * jax.random.normal(next(kit), (M,), dtype=jnp.float32)
    params = {"encoder": encoder_params, "decoder": (wd, bd)}

    # Deterministic synthetic inputs.
    batch_vertices = jax.random.normal(next(kit), (B, N, n_dim),
                                       dtype=jnp.float32)     # get_batch_vertices
    local_features = jax.random.normal(next(kit), (B, N, local_dim),
                                       dtype=jnp.float32)     # get_local_features out
    global_features = jax.random.normal(next(kit), (B, global_dim),
                                        dtype=jnp.float32)

    # One-time weight packing (outside the per-call path).
    packed = prepack_params(params, n_dim=n_dim, local_dim=local_dim,
                            global_dim=global_dim, v_num=N)

    ref = deform_gcn_reference(batch_vertices, local_features, global_features,
                               a_hat, params)

    # f32 MXU operands: strict correctness check of the kernel structure.
    out_f32 = deform_gcn_forward(batch_vertices, local_features,
                                 global_features, a_hat, packed,
                                 matmul_dtype=jnp.float32)
    out_f32 = jax.block_until_ready(out_f32)
    assert out_f32.shape == (B, N, 3)
    assert out_f32.dtype == jnp.float32
    np.testing.assert_allclose(np.asarray(out_f32), np.asarray(ref),
                               rtol=1e-3, atol=1e-3)

    # bf16 MXU operands (recommended on v6e/v7x): looser numerical sanity check.
    out_bf16 = deform_gcn_forward(batch_vertices, local_features,
                                  global_features, a_hat, packed,
                                  matmul_dtype=jnp.bfloat16)
    out_bf16 = jax.block_until_ready(out_bf16)
    assert out_bf16.shape == (B, N, 3)
    max_abs_err = float(np.max(np.abs(np.asarray(out_bf16) - np.asarray(ref))))
    assert max_abs_err < 5e-3, f"bf16 path max abs err too large: {max_abs_err}"

    print("KERNEL_OK")
</pallas_src>

<mosaic_0001>
module attributes {stable_mosaic.version = 11 : i64} {
  func.func @deform_gcn_kernel(%arg0: i32, %arg1: memref<1x64x128xf32, #tpu.memory_space<vmem>>, %arg2: memref<1x1x128xf32, #tpu.memory_space<vmem>>, %arg3: memref<64x64xf32, #tpu.memory_space<vmem>>, %arg4: memref<128x128xf32, #tpu.memory_space<vmem>>, %arg5: memref<128x128xf32, #tpu.memory_space<vmem>>, %arg6: memref<5x128x128xf32, #tpu.memory_space<vmem>>, %arg7: memref<6x1x128xf32, #tpu.memory_space<vmem>>, %arg8: memref<3x256x64xf32, #tpu.memory_space<vmem>>, %arg9: memref<256x1xf32, #tpu.memory_space<vmem>>, %arg10: memref<1x256x1xf32, #tpu.memory_space<vmem>>) attributes {dimension_semantics = [#tpu.dimension_semantics<parallel>], iteration_bounds = array<i64: 2>, scalar_prefetch = 0 : i64, scratch_operands = 0 : i64, tpu.core_type = #tpu.core_type<tc>, window_params = [{transform_indices = @transform_0, window_bounds = array<i64: 1, 64, 128>}, {transform_indices = @transform_1, window_bounds = array<i64: 1, 1, 128>}, {pipeline_mode = #tpu.pipeline_mode<synchronous>, transform_indices = @transform_2, window_bounds = array<i64: 64, 64>}, {pipeline_mode = #tpu.pipeline_mode<synchronous>, transform_indices = @transform_3, window_bounds = array<i64: 128, 128>}, {pipeline_mode = #tpu.pipeline_mode<synchronous>, transform_indices = @transform_4, window_bounds = array<i64: 128, 128>}, {pipeline_mode = #tpu.pipeline_mode<synchronous>, transform_indices = @transform_5, window_bounds = array<i64: 5, 128, 128>}, {pipeline_mode = #tpu.pipeline_mode<synchronous>, transform_indices = @transform_6, window_bounds = array<i64: 6, 1, 128>}, {pipeline_mode = #tpu.pipeline_mode<synchronous>, transform_indices = @transform_7, window_bounds = array<i64: 3, 256, 64>}, {pipeline_mode = #tpu.pipeline_mode<synchronous>, transform_indices = @transform_8, window_bounds = array<i64: 256, 1>}, {transform_indices = @transform_9, window_bounds = array<i64: 1, 256, 1>}]} {
    %c0 = arith.constant 0 : index
    %c0_0 = arith.constant 0 : index
    %0 = vector.load %arg3[%c0, %c0_0] : memref<64x64xf32, #tpu.memory_space<vmem>>, vector<64x64xf32>
    %c0_1 = arith.constant 0 : index
    %c0_2 = arith.constant 0 : index
    %c0_3 = arith.constant 0 : index
    %1 = vector.load %arg1[%c0_1, %c0_2, %c0_3] : memref<1x64x128xf32, #tpu.memory_space<vmem>>, vector<1x64x128xf32>
    %2 = vector.shape_cast %1 : vector<1x64x128xf32> to vector<64x128xf32>
    %c0_4 = arith.constant 0 : index
    %c0_5 = arith.constant 0 : index
    %3 = vector.load %arg4[%c0_4, %c0_5] : memref<128x128xf32, #tpu.memory_space<vmem>>, vector<128x128xf32>
    %cst = arith.constant dense<0.000000e+00> : vector<64x128xf32>
    %4 = tpu.matmul %2, %3, %cst {dimension_numbers = #tpu.dot_dimension_numbers<[1], [0], [0], [1], [0, 0, 1, 1], [], []>} : vector<64x128xf32>, vector<128x128xf32>, vector<64x128xf32> -> vector<64x128xf32>
    %c0_6 = arith.constant 0 : index
    %c0_7 = arith.constant 0 : index
    %c0_8 = arith.constant 0 : index
    %5 = vector.load %arg2[%c0_6, %c0_7, %c0_8] : memref<1x1x128xf32, #tpu.memory_space<vmem>>, vector<1x1x128xf32>
    %6 = vector.shape_cast %5 : vector<1x1x128xf32> to vector<1x128xf32>
    %c0_9 = arith.constant 0 : index
    %c0_10 = arith.constant 0 : index
    %7 = vector.load %arg5[%c0_9, %c0_10] : memref<128x128xf32, #tpu.memory_space<vmem>>, vector<128x128xf32>
    %cst_11 = arith.constant dense<0.000000e+00> : vector<1x128xf32>
    %8 = tpu.matmul %6, %7, %cst_11 {dimension_numbers = #tpu.dot_dimension_numbers<[1], [0], [0], [1], [0, 0, 1, 1], [], []>} : vector<1x128xf32>, vector<128x128xf32>, vector<1x128xf32> -> vector<1x128xf32>
    %9 = vector.broadcast %8 : vector<1x128xf32> to vector<64x128xf32>
    %10 = arith.addf %4, %9 : vector<64x128xf32>
    %cst_12 = arith.constant dense<0.000000e+00> : vector<64x128xf32>
    %11 = tpu.matmul %0, %10, %cst_12 {dimension_numbers = #tpu.dot_dimension_numbers<[1], [0], [0], [1], [0, 0, 1, 1], [], []>} : vector<64x64xf32>, vector<64x128xf32>, vector<64x128xf32> -> vector<64x128xf32>
    %c0_13 = arith.constant 0 : index
    %c0_14 = arith.constant 0 : index
    %c0_15 = arith.constant 0 : index
    %12 = vector.load %arg7[%c0_13, %c0_14, %c0_15] : memref<6x1x128xf32, #tpu.memory_space<vmem>>, vector<1x1x128xf32>
    %13 = vector.shape_cast %12 : vector<1x1x128xf32> to vector<1x128xf32>
    %14 = vector.broadcast %13 : vector<1x128xf32> to vector<64x128xf32>
    %15 = arith.addf %11, %14 : vector<64x128xf32>
    %c0_16 = arith.constant 0 : index
    %c0_17 = arith.constant 0 : index
    %c0_18 = arith.constant 0 : index
    %16 = vector.load %arg6[%c0_16, %c0_17, %c0_18] : memref<5x128x128xf32, #tpu.memory_space<vmem>>, vector<1x128x128xf32>
    %17 = vector.shape_cast %16 : vector<1x128x128xf32> to vector<128x128xf32>
    %cst_19 = arith.constant dense<0.000000e+00> : vector<64x128xf32>
    %18 = tpu.matmul %15, %17, %cst_19 {dimension_numbers = #tpu.dot_dimension_numbers<[1], [0], [0], [1], [0, 0, 1, 1], [], []>} : vector<64x128xf32>, vector<128x128xf32>, vector<64x128xf32> -> vector<64x128xf32>
    %cst_20 = arith.constant dense<0.000000e+00> : vector<64x128xf32>
    %19 = tpu.matmul %0, %18, %cst_20 {dimension_numbers = #tpu.dot_dimension_numbers<[1], [0], [0], [1], [0, 0, 1, 1], [], []>} : vector<64x64xf32>, vector<64x128xf32>, vector<64x128xf32> -> vector<64x128xf32>
    %c1 = arith.constant 1 : index
    %c0_21 = arith.constant 0 : index
    %c0_22 = arith.constant 0 : index
    %20 = vector.load %arg7[%c1, %c0_21, %c0_22] : memref<6x1x128xf32, #tpu.memory_space<vmem>>, vector<1x1x128xf32>
    %21 = vector.shape_cast %20 : vector<1x1x128xf32> to vector<1x128xf32>
    %22 = vector.broadcast %21 : vector<1x128xf32> to vector<64x128xf32>
    %23 = arith.addf %19, %22 : vector<64x128xf32>
    %cst_23 = arith.constant 0.000000e+00 : f32
    %24 = vector.broadcast %cst_23 : f32 to vector<64x128xf32>
    %25 = arith.cmpf oge, %23, %24 : vector<64x128xf32>
    %cst_24 = arith.constant 0.00999999977 : f32
    %26 = vector.broadcast %cst_24 : f32 to vector<64x128xf32>
    %27 = arith.mulf %26, %23 : vector<64x128xf32>
    %28 = arith.select %25, %23, %27 : vector<64x128xi1>, vector<64x128xf32>
    %c1_25 = arith.constant 1 : index
    %c0_26 = arith.constant 0 : index
    %c0_27 = arith.constant 0 : index
    %29 = vector.load %arg6[%c1_25, %c0_26, %c0_27] : memref<5x128x128xf32, #tpu.memory_space<vmem>>, vector<1x128x128xf32>
    %30 = vector.shape_cast %29 : vector<1x128x128xf32> to vector<128x128xf32>
    %cst_28 = arith.constant dense<0.000000e+00> : vector<64x128xf32>
    %31 = tpu.matmul %28, %30, %cst_28 {dimension_numbers = #tpu.dot_dimension_numbers<[1], [0], [0], [1], [0, 0, 1, 1], [], []>} : vector<64x128xf32>, vector<128x128xf32>, vector<64x128xf32> -> vector<64x128xf32>
    %cst_29 = arith.constant dense<0.000000e+00> : vector<64x128xf32>
    %32 = tpu.matmul %0, %31, %cst_29 {dimension_numbers = #tpu.dot_dimension_numbers<[1], [0], [0], [1], [0, 0, 1, 1], [], []>} : vector<64x64xf32>, vector<64x128xf32>, vector<64x128xf32> -> vector<64x128xf32>
    %c2 = arith.constant 2 : index
    %c0_30 = arith.constant 0 : index
    %c0_31 = arith.constant 0 : index
    %33 = vector.load %arg7[%c2, %c0_30, %c0_31] : memref<6x1x128xf32, #tpu.memory_space<vmem>>, vector<1x1x128xf32>
    %34 = vector.shape_cast %33 : vector<1x1x128xf32> to vector<1x128xf32>
    %35 = vector.broadcast %34 : vector<1x128xf32> to vector<64x128xf32>
    %36 = arith.addf %32, %35 : vector<64x128xf32>
    %c2_32 = arith.constant 2 : index
    %c0_33 = arith.constant 0 : index
    %c0_34 = arith.constant 0 : index
    %37 = vector.load %arg6[%c2_32, %c0_33, %c0_34] : memref<5x128x128xf32, #tpu.memory_space<vmem>>, vector<1x128x128xf32>
    %38 = vector.shape_cast %37 : vector<1x128x128xf32> to vector<128x128xf32>
    %cst_35 = arith.constant dense<0.000000e+00> : vector<64x128xf32>
    %39 = tpu.matmul %36, %38, %cst_35 {dimension_numbers = #tpu.dot_dimension_numbers<[1], [0], [0], [1], [0, 0, 1, 1], [], []>} : vector<64x128xf32>, vector<128x128xf32>, vector<64x128xf32> -> vector<64x128xf32>
    %cst_36 = arith.constant dense<0.000000e+00> : vector<64x128xf32>
    %40 = tpu.matmul %0, %39, %cst_36 {dimension_numbers = #tpu.dot_dimension_numbers<[1], [0], [0], [1], [0, 0, 1, 1], [], []>} : vector<64x64xf32>, vector<64x128xf32>, vector<64x128xf32> -> vector<64x128xf32>
    %c3 = arith.constant 3 : index
    %c0_37 = arith.constant 0 : index
    %c0_38 = arith.constant 0 : index
    %41 = vector.load %arg7[%c3, %c0_37, %c0_38] : memref<6x1x128xf32, #tpu.memory_space<vmem>>, vector<1x1x128xf32>
    %42 = vector.shape_cast %41 : vector<1x1x128xf32> to vector<1x128xf32>
    %43 = vector.broadcast %42 : vector<1x128xf32> to vector<64x128xf32>
    %44 = arith.addf %40, %43 : vector<64x128xf32>
    %cst_39 = arith.constant 0.000000e+00 : f32
    %45 = vector.broadcast %cst_39 : f32 to vector<64x128xf32>
    %46 = arith.cmpf oge, %44, %45 : vector<64x128xf32>
    %cst_40 = arith.constant 0.00999999977 : f32
    %47 = vector.broadcast %cst_40 : f32 to vector<64x128xf32>
    %48 = arith.mulf %47, %44 : vector<64x128xf32>
    %49 = arith.select %46, %44, %48 : vector<64x128xi1>, vector<64x128xf32>
    %c3_41 = arith.constant 3 : index
    %c0_42 = arith.constant 0 : index
    %c0_43 = arith.constant 0 : index
    %50 = vector.load %arg6[%c3_41, %c0_42, %c0_43] : memref<5x128x128xf32, #tpu.memory_space<vmem>>, vector<1x128x128xf32>
    %51 = vector.shape_cast %50 : vector<1x128x128xf32> to vector<128x128xf32>
    %cst_44 = arith.constant dense<0.000000e+00> : vector<64x128xf32>
    %52 = tpu.matmul %49, %51, %cst_44 {dimension_numbers = #tpu.dot_dimension_numbers<[1], [0], [0], [1], [0, 0, 1, 1], [], []>} : vector<64x128xf32>, vector<128x128xf32>, vector<64x128xf32> -> vector<64x128xf32>
    %cst_45 = arith.constant dense<0.000000e+00> : vector<64x128xf32>
    %53 = tpu.matmul %0, %52, %cst_45 {dimension_numbers = #tpu.dot_dimension_numbers<[1], [0], [0], [1], [0, 0, 1, 1], [], []>} : vector<64x64xf32>, vector<64x128xf32>, vector<64x128xf32> -> vector<64x128xf32>
    %c4 = arith.constant 4 : index
    %c0_46 = arith.constant 0 : index
    %c0_47 = arith.constant 0 : index
    %54 = vector.load %arg7[%c4, %c0_46, %c0_47] : memref<6x1x128xf32, #tpu.memory_space<vmem>>, vector<1x1x128xf32>
    %55 = vector.shape_cast %54 : vector<1x1x128xf32> to vector<1x128xf32>
    %56 = vector.broadcast %55 : vector<1x128xf32> to vector<64x128xf32>
    %57 = arith.addf %53, %56 : vector<64x128xf32>
    %c4_48 = arith.constant 4 : index
    %c0_49 = arith.constant 0 : index
    %c0_50 = arith.constant 0 : index
    %58 = vector.load %arg6[%c4_48, %c0_49, %c0_50] : memref<5x128x128xf32, #tpu.memory_space<vmem>>, vector<1x128x128xf32>
    %59 = vector.shape_cast %58 : vector<1x128x128xf32> to vector<128x128xf32>
    %cst_51 = arith.constant dense<0.000000e+00> : vector<64x128xf32>
    %60 = tpu.matmul %57, %59, %cst_51 {dimension_numbers = #tpu.dot_dimension_numbers<[1], [0], [0], [1], [0, 0, 1, 1], [], []>} : vector<64x128xf32>, vector<128x128xf32>, vector<64x128xf32> -> vector<64x128xf32>
    %cst_52 = arith.constant dense<0.000000e+00> : vector<64x128xf32>
    %61 = tpu.matmul %0, %60, %cst_52 {dimension_numbers = #tpu.dot_dimension_numbers<[1], [0], [0], [1], [0, 0, 1, 1], [], []>} : vector<64x64xf32>, vector<64x128xf32>, vector<64x128xf32> -> vector<64x128xf32>
    %c5 = arith.constant 5 : index
    %c0_53 = arith.constant 0 : index
    %c0_54 = arith.constant 0 : index
    %62 = vector.load %arg7[%c5, %c0_53, %c0_54] : memref<6x1x128xf32, #tpu.memory_space<vmem>>, vector<1x1x128xf32>
    %63 = vector.shape_cast %62 : vector<1x1x128xf32> to vector<1x128xf32>
    %64 = vector.broadcast %63 : vector<1x128xf32> to vector<64x128xf32>
    %65 = arith.addf %61, %64 : vector<64x128xf32>
    %cst_55 = arith.constant 0.000000e+00 : f32
    %66 = vector.broadcast %cst_55 : f32 to vector<64x128xf32>
    %67 = arith.cmpf oge, %65, %66 : vector<64x128xf32>
    %cst_56 = arith.constant 0.00999999977 : f32
    %68 = vector.broadcast %cst_56 : f32 to vector<64x128xf32>
    %69 = arith.mulf %68, %65 : vector<64x128xf32>
    %70 = arith.select %67, %65, %69 : vector<64x128xi1>, vector<64x128xf32>
    %c0_57 = arith.constant 0 : index
    %c0_58 = arith.constant 0 : index
    %71 = vector.load %arg9[%c0_57, %c0_58] : memref<256x1xf32, #tpu.memory_space<vmem>>, vector<256x1xf32>
    %c0_59 = arith.constant 0 : index
    %c0_60 = arith.constant 0 : index
    %c0_61 = arith.constant 0 : index
    %72 = vector.load %arg8[%c0_59, %c0_60, %c0_61] : memref<3x256x64xf32, #tpu.memory_space<vmem>>, vector<1x256x64xf32>
    %73 = vector.shape_cast %72 : vector<1x256x64xf32> to vector<256x64xf32>
    %74 = vector.extract_strided_slice %70 {offsets = [0, 0], sizes = [64, 1], strides = [1, 1]} : vector<64x128xf32> to vector<64x1xf32>
    %cst_62 = arith.constant dense<0.000000e+00> : vector<256x1xf32>
    %75 = tpu.matmul %73, %74, %cst_62 {dimension_numbers = #tpu.dot_dimension_numbers<[1], [0], [0], [1], [0, 0, 1, 1], [], []>} : vector<256x64xf32>, vector<64x1xf32>, vector<256x1xf32> -> vector<256x1xf32>
    %76 = arith.addf %71, %75 : vector<256x1xf32>
    %c1_63 = arith.constant 1 : index
    %c0_64 = arith.constant 0 : index
    %c0_65 = arith.constant 0 : index
    %77 = vector.load %arg8[%c1_63, %c0_64, %c0_65] : memref<3x256x64xf32, #tpu.memory_space<vmem>>, vector<1x256x64xf32>
    %78 = vector.shape_cast %77 : vector<1x256x64xf32> to vector<256x64xf32>
    %79 = vector.extract_strided_slice %70 {offsets = [0, 1], sizes = [64, 1], strides = [1, 1]} : vector<64x128xf32> to vector<64x1xf32>
    %cst_66 = arith.constant dense<0.000000e+00> : vector<256x1xf32>
    %80 = tpu.matmul %78, %79, %cst_66 {dimension_numbers = #tpu.dot_dimension_numbers<[1], [0], [0], [1], [0, 0, 1, 1], [], []>} : vector<256x64xf32>, vector<64x1xf32>, vector<256x1xf32> -> vector<256x1xf32>
    %81 = arith.addf %76, %80 : vector<256x1xf32>
    %c2_67 = arith.constant 2 : index
    %c0_68 = arith.constant 0 : index
    %c0_69 = arith.constant 0 : index
    %82 = vector.load %arg8[%c2_67, %c0_68, %c0_69] : memref<3x256x64xf32, #tpu.memory_space<vmem>>, vector<1x256x64xf32>
    %83 = vector.shape_cast %82 : vector<1x256x64xf32> to vector<256x64xf32>
    %84 = vector.extract_strided_slice %70 {offsets = [0, 2], sizes = [64, 1], strides = [1, 1]} : vector<64x128xf32> to vector<64x1xf32>
    %cst_70 = arith.constant dense<0.000000e+00> : vector<256x1xf32>
    %85 = tpu.matmul %83, %84, %cst_70 {dimension_numbers = #tpu.dot_dimension_numbers<[1], [0], [0], [1], [0, 0, 1, 1], [], []>} : vector<256x64xf32>, vector<64x1xf32>, vector<256x1xf32> -> vector<256x1xf32>
    %86 = arith.addf %81, %85 : vector<256x1xf32>
    %87 = math.tanh %86 : vector<256x1xf32>
    %cst_71 = arith.constant 1.000000e-01 : f32
    %88 = vector.broadcast %cst_71 : f32 to vector<256x1xf32>
    %89 = arith.mulf %87, %88 : vector<256x1xf32>
    %c0_72 = arith.constant 0 : index
    %c0_73 = arith.constant 0 : index
    %c0_74 = arith.constant 0 : index
    %90 = vector.load %arg10[%c0_72, %c0_73, %c0_74] : memref<1x256x1xf32, #tpu.memory_space<vmem>>, vector<1x256x1xf32>
    %91 = vector.shape_cast %90 : vector<1x256x1xf32> to vector<256x1xf32>
    %92 = vector.shape_cast %89 : vector<256x1xf32> to vector<1x256x1xf32>
    tpu.vector_store %arg10[%c0_72, %c0_73, %c0_74], %92 {strides = array<i32>} : memref<1x256x1xf32, #tpu.memory_space<vmem>>, vector<1x256x1xf32>,
    return
  }
  func.func @transform_0(%arg0: i32) -> (i32, i32, i32) {
    %c0_i32 = arith.constant 0 : i32
    %c0_i32_0 = arith.constant 0 : i32
    %c0_i32_1 = arith.constant 0 : i32
    return %arg0, %c0_i32, %c0_i32_0 : i32, i32, i32
  }
  func.func @transform_1(%arg0: i32) -> (i32, i32, i32) {
    %c0_i32 = arith.constant 0 : i32
    %c0_i32_0 = arith.constant 0 : i32
    %c0_i32_1 = arith.constant 0 : i32
    return %arg0, %c0_i32, %c0_i32_0 : i32, i32, i32
  }
  func.func @transform_2(%arg0: i32) -> (i32, i32) {
    %c0_i32 = arith.constant 0 : i32
    %c0_i32_0 = arith.constant 0 : i32
    %c0_i32_1 = arith.constant 0 : i32
    return %c0_i32, %c0_i32_0 : i32, i32
  }
  func.func @transform_3(%arg0: i32) -> (i32, i32) {
    %c0_i32 = arith.constant 0 : i32
    %c0_i32_0 = arith.constant 0 : i32
    %c0_i32_1 = arith.constant 0 : i32
    return %c0_i32, %c0_i32_0 : i32, i32
  }
  func.func @transform_4(%arg0: i32) -> (i32, i32) {
    %c0_i32 = arith.constant 0 : i32
    %c0_i32_0 = arith.constant 0 : i32
    %c0_i32_1 = arith.constant 0 : i32
    return %c0_i32, %c0_i32_0 : i32, i32
  }
  func.func @transform_5(%arg0: i32) -> (i32, i32, i32) {
    %c0_i32 = arith.constant 0 : i32
    %c0_i32_0 = arith.constant 0 : i32
    %c0_i32_1 = arith.constant 0 : i32
    %c0_i32_2 = arith.constant 0 : i32
    return %c0_i32, %c0_i32_0, %c0_i32_1 : i32, i32, i32
  }
  func.func @transform_6(%arg0: i32) -> (i32, i32, i32) {
    %c0_i32 = arith.constant 0 : i32
    %c0_i32_0 = arith.constant 0 : i32
    %c0_i32_1 = arith.constant 0 : i32
    %c0_i32_2 = arith.constant 0 : i32
    return %c0_i32, %c0_i32_0, %c0_i32_1 : i32, i32, i32
  }
  func.func @transform_7(%arg0: i32) -> (i32, i32, i32) {
    %c0_i32 = arith.constant 0 : i32
    %c0_i32_0 = arith.constant 0 : i32
    %c0_i32_1 = arith.constant 0 : i32
    %c0_i32_2 = arith.constant 0 : i32
    return %c0_i32, %c0_i32_0, %c0_i32_1 : i32, i32, i32
  }
  func.func @transform_8(%arg0: i32) -> (i32, i32) {
    %c0_i32 = arith.constant 0 : i32
    %c0_i32_0 = arith.constant 0 : i32
    %c0_i32_1 = arith.constant 0 : i32
    return %c0_i32, %c0_i32_0 : i32, i32
  }
  func.func @transform_9(%arg0: i32) -> (i32, i32, i32) {
    %c0_i32 = arith.constant 0 : i32
    %c0_i32_0 = arith.constant 0 : i32
    %c0_i32_1 = arith.constant 0 : i32
    return %arg0, %c0_i32, %c0_i32_0 : i32, i32, i32
  }
}

</mosaic_0001>

<llo_original>
// kernel: squeeze.1
$region0: #{squeeze.1}
  %s0 = inlined_call_operand.vmem [shape: f32[2,192], index: 0, kind: input, shape index: {}]
  %s1 = inlined_call_operand.vmem [shape: f32[2,64,3], index: 1, kind: output, shape index: {}]
  $region1: #{squeeze.1} parent=0
    #allocation0 [shape = 'u8[8192]{0}', space=vmem, size = 0x2000, scoped, tag = 'scoped mem for input reshape']
    %s3 = ssub.s32 4, 1
    %s4 = scalar_lea.vmem %s0, 2
    %v5 = vld [vmem:[%s4] sm:%s3]
    %s6 = scalar_lea.vmem [#allocation0], 8
    %7 = vst [vmem:[%s6] sm:%s3] %v5
    %v8 = vld [vmem:[%s0] sm:%s3]
    %9 = vst [vmem:[#allocation0] sm:%s3] %v8
    %v10 = vld [vmem:[#allocation0] sm:$0x3]
    %vm11 = vcmask 23552
    %12 = vst.msk [vmem:[%s1] sm:$0x1] %vm11, %v10
    %s13 = scalar_lea.vmem %s1, 63
    %14 = vst.msk [vmem:[%s13] sm:$0x2] %vm11, %v10
    %s15 = scalar_lea.vmem [#allocation0], 8
    %v16 = vld [vmem:[%s15] sm:$0x3]
    %17 = vrot.lane.b32.xlu0 %v16, 127
    %v18 = vpop.permute.xlu0 %17
    %vm19 = vcmask 23552
    %s20 = scalar_lea.vmem %s1, 43
    %21 = vst.msk [vmem:[%s20] sm:$0x1] %vm19, %v18
    %s22 = scalar_lea.vmem %s1, 106
    %23 = vst.msk [vmem:[%s22] sm:$0x2] %vm19, %v18
    %v24 = vld [vmem:[#allocation0] sm:$0x3]
    %25 = vrot.lane.b32.xlu0 %v24, 125
    %v26 = vpop.permute.xlu0 %25
    %vm27 = vcmask 23552
    %s28 = scalar_lea.vmem %s1, 1
    %29 = vst.msk [vmem:[%s28] sm:$0x1] %vm27, %v26
    %s30 = scalar_lea.vmem %s1, 64
    %31 = vst.msk [vmem:[%s30] sm:$0x2] %vm27, %v26
    %s32 = scalar_lea.vmem [#allocation0], 8
    %v33 = vld [vmem:[%s32] sm:$0x3]
    %34 = vrot.lane.b32.xlu0 %v33, 124
    %v35 = vpop.permute.xlu0 %34
    %vm36 = vcmask 23552
    %s37 = scalar_lea.vmem %s1, 44
    %38 = vst.msk [vmem:[%s37] sm:$0x1] %vm36, %v35
    %s39 = scalar_lea.vmem %s1, 107
    %40 = vst.msk [vmem:[%s39] sm:$0x2] %vm36, %v35
    %v41 = vld [vmem:[#allocation0] sm:$0x3]
    %42 = vrot.lane.b32.xlu0 %v41, 122
    %v43 = vpop.permute.xlu0 %42
    %vm44 = vcmask 23552
    %s45 = scalar_lea.vmem %s1, 2
    %46 = vst.msk [vmem:[%s45] sm:$0x1] %vm44, %v43
    %s47 = scalar_lea.vmem %s1, 65
    %48 = vst.msk [vmem:[%s47] sm:$0x2] %vm44, %v43
    %s49 = scalar_lea.vmem [#allocation0], 8
    %v50 = vld [vmem:[%s49] sm:$0x3]
    %51 = vrot.lane.b32.xlu0 %v50, 121
    %v52 = vpop.permute.xlu0 %51
    %vm53 = vcmask 23552
    %s54 = scalar_lea.vmem %s1, 45
    %55 = vst.msk [vmem:[%s54] sm:$0x1] %vm53, %v52
    %s56 = scalar_lea.vmem %s1, 108
    %57 = vst.msk [vmem:[%s56] sm:$0x2] %vm53, %v52
    %v58 = vld [vmem:[#allocation0] sm:$0x3]
    %59 = vrot.lane.b32.xlu0 %v58, 119
    %v60 = vpop.permute.xlu0 %59
    %vm61 = vcmask 23552
    %s62 = scalar_lea.vmem %s1, 3
    %63 = vst.msk [vmem:[%s62] sm:$0x1] %vm61, %v60
    %s64 = scalar_lea.vmem %s1, 66
    %65 = vst.msk [vmem:[%s64] sm:$0x2] %vm61, %v60
    %s66 = scalar_lea.vmem [#allocation0], 8
    %v67 = vld [vmem:[%s66] sm:$0x3]
    %68 = vrot.lane.b32.xlu0 %v67, 118
    %v69 = vpop.permute.xlu0 %68
    %vm70 = vcmask 23552
    %s71 = scalar_lea.vmem %s1, 46
    %72 = vst.msk [vmem:[%s71] sm:$0x1] %vm70, %v69
    %s73 = scalar_lea.vmem %s1, 109
    %74 = vst.msk [vmem:[%s73] sm:$0x2] %vm70, %v69
    %v75 = vld [vmem:[#allocation0] sm:$0x3]
    %76 = vrot.lane.b32.xlu0 %v75, 116
    %v77 = vpop.permute.xlu0 %76
    %vm78 = vcmask 23552
    %s79 = scalar_lea.vmem %s1, 4
    %80 = vst.msk [vmem:[%s79] sm:$0x1] %vm78, %v77
    %s81 = scalar_lea.vmem %s1, 67
    %82 = vst.msk [vmem:[%s81] sm:$0x2] %vm78, %v77
    %s83 = scalar_lea.vmem [#allocation0], 8
    %v84 = vld [vmem:[%s83] sm:$0x3]
    %85 = vrot.lane.b32.xlu0 %v84, 115
    %v86 = vpop.permute.xlu0 %85
    %vm87 = vcmask 23552
    %s88 = scalar_lea.vmem %s1, 47
    %89 = vst.msk [vmem:[%s88] sm:$0x1] %vm87, %v86
    %s90 = scalar_lea.vmem %s1, 110
    %91 = vst.msk [vmem:[%s90] sm:$0x2] %vm87, %v86
    %v92 = vld [vmem:[#allocation0] sm:$0x3]
    %93 = vrot.lane.b32.xlu0 %v92, 113
    %v94 = vpop.permute.xlu0 %93
    %vm95 = vcmask 23552
    %s96 = scalar_lea.vmem %s1, 5
    %97 = vst.msk [vmem:[%s96] sm:$0x1] %vm95, %v94
    %s98 = scalar_lea.vmem %s1, 68
    %99 = vst.msk [vmem:[%s98] sm:$0x2] %vm95, %v94
    %s100 = scalar_lea.vmem [#allocation0], 8
    %v101 = vld [vmem:[%s100] sm:$0x3]
    %102 = vrot.lane.b32.xlu0 %v101, 112
    %v103 = vpop.permute.xlu0 %102
    %vm104 = vcmask 23552
    %s105 = scalar_lea.vmem %s1, 48
    %106 = vst.msk [vmem:[%s105] sm:$0x1] %vm104, %v103
    %s107 = scalar_lea.vmem %s1, 111
    %108 = vst.msk [vmem:[%s107] sm:$0x2] %vm104, %v103
    %v109 = vld [vmem:[#allocation0] sm:$0x3]
    %110 = vrot.lane.b32.xlu0 %v109, 110
    %v111 = vpop.permute.xlu0 %110
    %vm112 = vcmask 23552
    %s113 = scalar_lea.vmem %s1, 6
    %114 = vst.msk [vmem:[%s113] sm:$0x1] %vm112, %v111
    %s115 = scalar_lea.vmem %s1, 69
    %116 = vst.msk [vmem:[%s115] sm:$0x2] %vm112, %v111
    %s117 = scalar_lea.vmem [#allocation0], 8
    %v118 = vld [vmem:[%s117] sm:$0x3]
    %119 = vrot.lane.b32.xlu0 %v118, 109
    %v120 = vpop.permute.xlu0 %119
    %vm121 = vcmask 23552
    %s122 = scalar_lea.vmem %s1, 49
    %123 = vst.msk [vmem:[%s122] sm:$0x1] %vm121, %v120
    %s124 = scalar_lea.vmem %s1, 112
    %125 = vst.msk [vmem:[%s124] sm:$0x2] %vm121, %v120
    %v126 = vld [vmem:[#allocation0] sm:$0x3]
    %127 = vrot.lane.b32.xlu0 %v126, 107
    %v128 = vpop.permute.xlu0 %127
    %vm129 = vcmask 23552
    %s130 = scalar_lea.vmem %s1, 7
    %131 = vst.msk [vmem:[%s130] sm:$0x1] %vm129, %v128
    %s132 = scalar_lea.vmem %s1, 70
    %133 = vst.msk [vmem:[%s132] sm:$0x2] %vm129, %v128
    %s134 = scalar_lea.vmem [#allocation0], 8
    %v135 = vld [vmem:[%s134] sm:$0x3]
    %136 = vrot.lane.b32.xlu0 %v135, 106
    %v137 = vpop.permute.xlu0 %136
    %vm138 = vcmask 23552
    %s139 = scalar_lea.vmem %s1, 50
    %140 = vst.msk [vmem:[%s139] sm:$0x1] %vm138, %v137
    %s141 = scalar_lea.vmem %s1, 113
    %142 = vst.msk [vmem:[%s141] sm:$0x2] %vm138, %v137
    %v143 = vld [vmem:[#allocation0] sm:$0x3]
    %144 = vrot.lane.b32.xlu0 %v143, 104
    %v145 = vpop.permute.xlu0 %144
    %vm146 = vcmask 23552
    %s147 = scalar_lea.vmem %s1, 8
    %148 = vst.msk [vmem:[%s147] sm:$0x1] %vm146, %v145
    %s149 = scalar_lea.vmem %s1, 71
    %150 = vst.msk [vmem:[%s149] sm:$0x2] %vm146, %v145
    %s151 = scalar_lea.vmem [#allocation0], 8
    %v152 = vld [vmem:[%s151] sm:$0x3]
    %153 = vrot.lane.b32.xlu0 %v152, 103
    %v154 = vpop.permute.xlu0 %153
    %vm155 = vcmask 23552
    %s156 = scalar_lea.vmem %s1, 51
    %157 = vst.msk [vmem:[%s156] sm:$0x1] %vm155, %v154
    %s158 = scalar_lea.vmem %s1, 114
    %159 = vst.msk [vmem:[%s158] sm:$0x2] %vm155, %v154
    %v160 = vld [vmem:[#allocation0] sm:$0x3]
    %161 = vrot.lane.b32.xlu0 %v160, 101
    %v162 = vpop.permute.xlu0 %161
    %vm163 = vcmask 23552
    %s164 = scalar_lea.vmem %s1, 9
    %165 = vst.msk [vmem:[%s164] sm:$0x1] %vm163, %v162
    %s166 = scalar_lea.vmem %s1, 72
    %167 = vst.msk [vmem:[%s166] sm:$0x2] %vm163, %v162
    %s168 = scalar_lea.vmem [#allocation0], 8
    %v169 = vld [vmem:[%s168] sm:$0x3]
    %170 = vrot.lane.b32.xlu0 %v169, 100
    %v171 = vpop.permute.xlu0 %170
    %vm172 = vcmask 23552
    %s173 = scalar_lea.vmem %s1, 52
    %174 = vst.msk [vmem:[%s173] sm:$0x1] %vm172, %v171
    %s175 = scalar_lea.vmem %s1, 115
    %176 = vst.msk [vmem:[%s175] sm:$0x2] %vm172, %v171
    %v177 = vld [vmem:[#allocation0] sm:$0x3]
    %178 = vrot.lane.b32.xlu0 %v177, 98
    %v179 = vpop.permute.xlu0 %178
    %vm180 = vcmask 23552
    %s181 = scalar_lea.vmem %s1, 10
    %182 = vst.msk [vmem:[%s181] sm:$0x1] %vm180, %v179
    %s183 = scalar_lea.vmem %s1, 73
    %184 = vst.msk [vmem:[%s183] sm:$0x2] %vm180, %v179
    %s185 = scalar_lea.vmem [#allocation0], 8
    %v186 = vld [vmem:[%s185] sm:$0x3]
    %187 = vrot.lane.b32.xlu0 %v186, 97
    %v188 = vpop.permute.xlu0 %187
    %vm189 = vcmask 23552
    %s190 = scalar_lea.vmem %s1, 53
    %191 = vst.msk [vmem:[%s190] sm:$0x1] %vm189, %v188
    %s192 = scalar_lea.vmem %s1, 116
    %193 = vst.msk [vmem:[%s192] sm:$0x2] %vm189, %v188
    %v194 = vld [vmem:[#allocation0] sm:$0x3]
    %195 = vrot.lane.b32.xlu0 %v194, 95
    %v196 = vpop.permute.xlu0 %195
    %vm197 = vcmask 23552
    %s198 = scalar_lea.vmem %s1, 11
    %199 = vst.msk [vmem:[%s198] sm:$0x1] %vm197, %v196
    %s200 = scalar_lea.vmem %s1, 74
    %201 = vst.msk [vmem:[%s200] sm:$0x2] %vm197, %v196
    %s202 = scalar_lea.vmem [#allocation0], 8
    %v203 = vld [vmem:[%s202] sm:$0x3]
    %204 = vrot.lane.b32.xlu0 %v203, 94
    %v205 = vpop.permute.xlu0 %204
    %vm206 = vcmask 23552
    %s207 = scalar_lea.vmem %s1, 54
    %208 = vst.msk [vmem:[%s207] sm:$0x1] %vm206, %v205
    %s209 = scalar_lea.vmem %s1, 117
    %210 = vst.msk [vmem:[%s209] sm:$0x2] %vm206, %v205
    %v211 = vld [vmem:[#allocation0] sm:$0x3]
    %212 = vrot.lane.b32.xlu0 %v211, 92
    %v213 = vpop.permute.xlu0 %212
    %vm214 = vcmask 23552
    %s215 = scalar_lea.vmem %s1, 12
    %216 = vst.msk [vmem:[%s215] sm:$0x1] %vm214, %v213
    %s217 = scalar_lea.vmem %s1, 75
    %218 = vst.msk [vmem:[%s217] sm:$0x2] %vm214, %v213
    %s219 = scalar_lea.vmem [#allocation0], 8
    %v220 = vld [vmem:[%s219] sm:$0x3]
    %221 = vrot.lane.b32.xlu0 %v220, 91
    %v222 = vpop.permute.xlu0 %221
    %vm223 = vcmask 23552
    %s224 = scalar_lea.vmem %s1, 55
    %225 = vst.msk [vmem:[%s224] sm:$0x1] %vm223, %v222
    %s226 = scalar_lea.vmem %s1, 118
    %227 = vst.msk [vmem:[%s226] sm:$0x2] %vm223, %v222
    %v228 = vld [vmem:[#allocation0] sm:$0x3]
    %229 = vrot.lane.b32.xlu0 %v228, 89
    %v230 = vpop.permute.xlu0 %229
    %vm231 = vcmask 23552
    %s232 = scalar_lea.vmem %s1, 13
    %233 = vst.msk [vmem:[%s232] sm:$0x1] %vm231, %v230
    %s234 = scalar_lea.vmem %s1, 76
    %235 = vst.msk [vmem:[%s234] sm:$0x2] %vm231, %v230
    %s236 = scalar_lea.vmem [#allocation0], 8
    %v237 = vld [vmem:[%s236] sm:$0x3]
    %238 = vrot.lane.b32.xlu0 %v237, 88
    %v239 = vpop.permute.xlu0 %238
    %vm240 = vcmask 23552
    %s241 = scalar_lea.vmem %s1, 56
    %242 = vst.msk [vmem:[%s241] sm:$0x1] %vm240, %v239
    %s243 = scalar_lea.vmem %s1, 119
    %244 = vst.msk [vmem:[%s243] sm:$0x2] %vm240, %v239
    %v245 = vld [vmem:[#allocation0] sm:$0x3]
    %246 = vrot.lane.b32.xlu0 %v245, 86
    %v247 = vpop.permute.xlu0 %246
    %vm248 = vcmask 23552
    %s249 = scalar_lea.vmem %s1, 14
    %250 = vst.msk [vmem:[%s249] sm:$0x1] %vm248, %v247
    %s251 = scalar_lea.vmem %s1, 77
    %252 = vst.msk [vmem:[%s251] sm:$0x2] %vm248, %v247
    %s253 = scalar_lea.vmem [#allocation0], 8
    %v254 = vld [vmem:[%s253] sm:$0x3]
    %255 = vrot.lane.b32.xlu0 %v254, 85
    %v256 = vpop.permute.xlu0 %255
    %vm257 = vcmask 23552
    %s258 = scalar_lea.vmem %s1, 57
    %259 = vst.msk [vmem:[%s258] sm:$0x1] %vm257, %v256
    %s260 = scalar_lea.vmem %s1, 120
    %261 = vst.msk [vmem:[%s260] sm:$0x2] %vm257, %v256
    %v262 = vld [vmem:[#allocation0] sm:$0x3]
    %263 = vrot.lane.b32.xlu0 %v262, 83
    %v264 = vpop.permute.xlu0 %263
    %vm265 = vcmask 23552
    %s266 = scalar_lea.vmem %s1, 15
    %267 = vst.msk [vmem:[%s266] sm:$0x1] %vm265, %v264
    %s268 = scalar_lea.vmem %s1, 78
    %269 = vst.msk [vmem:[%s268] sm:$0x2] %vm265, %v264
    %s270 = scalar_lea.vmem [#allocation0], 8
    %v271 = vld [vmem:[%s270] sm:$0x3]
    %272 = vrot.lane.b32.xlu0 %v271, 82
    %v273 = vpop.permute.xlu0 %272
    %vm274 = vcmask 23552
    %s275 = scalar_lea.vmem %s1, 58
    %276 = vst.msk [vmem:[%s275] sm:$0x1] %vm274, %v273
    %s277 = scalar_lea.vmem %s1, 121
    %278 = vst.msk [vmem:[%s277] sm:$0x2] %vm274, %v273
    %v279 = vld [vmem:[#allocation0] sm:$0x3]
    %280 = vrot.lane.b32.xlu0 %v279, 80
    %v281 = vpop.permute.xlu0 %280
    %vm282 = vcmask 23552
    %s283 = scalar_lea.vmem %s1, 16
    %284 = vst.msk [vmem:[%s283] sm:$0x1] %vm282, %v281
    %s285 = scalar_lea.vmem %s1, 79
    %286 = vst.msk [vmem:[%s285] sm:$0x2] %vm282, %v281
    %s287 = scalar_lea.vmem [#allocation0], 8
    %v288 = vld [vmem:[%s287] sm:$0x3]
    %289 = vrot.lane.b32.xlu0 %v288, 79
    %v290 = vpop.permute.xlu0 %289
    %vm291 = vcmask 23552
    %s292 = scalar_lea.vmem %s1, 59
    %293 = vst.msk [vmem:[%s292] sm:$0x1] %vm291, %v290
    %s294 = scalar_lea.vmem %s1, 122
    %295 = vst.msk [vmem:[%s294] sm:$0x2] %vm291, %v290
    %v296 = vld [vmem:[#allocation0] sm:$0x3]
    %297 = vrot.lane.b32.xlu0 %v296, 77
    %v298 = vpop.permute.xlu0 %297
    %vm299 = vcmask 23552
    %s300 = scalar_lea.vmem %s1, 17
    %301 = vst.msk [vmem:[%s300] sm:$0x1] %vm299, %v298
    %s302 = scalar_lea.vmem %s1, 80
    %303 = vst.msk [vmem:[%s302] sm:$0x2] %vm299, %v298
    %s304 = scalar_lea.vmem [#allocation0], 8
    %v305 = vld [vmem:[%s304] sm:$0x3]
    %306 = vrot.lane.b32.xlu0 %v305, 76
    %v307 = vpop.permute.xlu0 %306
    %vm308 = vcmask 23552
    %s309 = scalar_lea.vmem %s1, 60
    %310 = vst.msk [vmem:[%s309] sm:$0x1] %vm308, %v307
    %s311 = scalar_lea.vmem %s1, 123
    %312 = vst.msk [vmem:[%s311] sm:$0x2] %vm308, %v307
    %v313 = vld [vmem:[#allocation0] sm:$0x3]
    %314 = vrot.lane.b32.xlu0 %v313, 74
    %v315 = vpop.permute.xlu0 %314
    %vm316 = vcmask 23552
    %s317 = scalar_lea.vmem %s1, 18
    %318 = vst.msk [vmem:[%s317] sm:$0x1] %vm316, %v315
    %s319 = scalar_lea.vmem %s1, 81
    %320 = vst.msk [vmem:[%s319] sm:$0x2] %vm316, %v315
    %s321 = scalar_lea.vmem [#allocation0], 8
    %v322 = vld [vmem:[%s321] sm:$0x3]
    %323 = vrot.lane.b32.xlu0 %v322, 73
    %v324 = vpop.permute.xlu0 %323
    %vm325 = vcmask 23552
    %s326 = scalar_lea.vmem %s1, 61
    %327 = vst.msk [vmem:[%s326] sm:$0x1] %vm325, %v324
    %s328 = scalar_lea.vmem %s1, 124
    %329 = vst.msk [vmem:[%s328] sm:$0x2] %vm325, %v324
    %v330 = vld [vmem:[#allocation0] sm:$0x3]
    %331 = vrot.lane.b32.xlu0 %v330, 71
    %v332 = vpop.permute.xlu0 %331
    %vm333 = vcmask 23552
    %s334 = scalar_lea.vmem %s1, 19
    %335 = vst.msk [vmem:[%s334] sm:$0x1] %vm333, %v332
    %s336 = scalar_lea.vmem %s1, 82
    %337 = vst.msk [vmem:[%s336] sm:$0x2] %vm333, %v332
    %s338 = scalar_lea.vmem [#allocation0], 8
    %v339 = vld [vmem:[%s338] sm:$0x3]
    %340 = vrot.lane.b32.xlu0 %v339, 70
    %v341 = vpop.permute.xlu0 %340
    %vm342 = vcmask 23552
    %s343 = scalar_lea.vmem %s1, 62
    %344 = vst.msk [vmem:[%s343] sm:$0x1] %vm342, %v341
    %s345 = scalar_lea.vmem %s1, 125
    %346 = vst.msk [vmem:[%s345] sm:$0x2] %vm342, %v341
    %v347 = vld [vmem:[#allocation0] sm:$0x3]
    %348 = vrot.lane.b32.xlu0 %v347, 68
    %v349 = vpop.permute.xlu0 %348
    %vm350 = vcmask 23552
    %s351 = scalar_lea.vmem %s1, 20
    %352 = vst.msk [vmem:[%s351] sm:$0x1] %vm350, %v349
    %s353 = scalar_lea.vmem %s1, 83
    %354 = vst.msk [vmem:[%s353] sm:$0x2] %vm350, %v349
    %s355 = scalar_lea.vmem [#allocation0], 8
    %v356 = vld [vmem:[%s355] sm:$0x3]
    %357 = vrot.lane.b32.xlu0 %v356, 67
    %v358 = vpop.permute.xlu0 %357
    %vm359 = vcmask 23552
    %s360 = scalar_lea.vmem %s1, 63
    %361 = vst.msk [vmem:[%s360] sm:$0x1] %vm359, %v358
    %s362 = scalar_lea.vmem %s1, 126
    %363 = vst.msk [vmem:[%s362] sm:$0x2] %vm359, %v358
    %v364 = vld [vmem:[#allocation0] sm:$0x3]
    %365 = vrot.lane.b32.xlu0 %v364, 65
    %v366 = vpop.permute.xlu0 %365
    %vm367 = vcmask 23552
    %s368 = scalar_lea.vmem %s1, 21
    %369 = vst.msk [vmem:[%s368] sm:$0x1] %vm367, %v366
    %s370 = scalar_lea.vmem %s1, 84
    %371 = vst.msk [vmem:[%s370] sm:$0x2] %vm367, %v366
    %v372 = vld [vmem:[#allocation0] sm:$0x3]
    %373 = vrot.lane.b32.xlu0 %v372, 62
    %v374 = vpop.permute.xlu0 %373
    %vm375 = vcmask 23552
    %s376 = scalar_lea.vmem %s1, 22
    %377 = vst.msk [vmem:[%s376] sm:$0x1] %vm375, %v374
    %s378 = scalar_lea.vmem %s1, 85
    %379 = vst.msk [vmem:[%s378] sm:$0x2] %vm375, %v374
    %v380 = vld [vmem:[#allocation0] sm:$0x3]
    %381 = vrot.lane.b32.xlu0 %v380, 59
    %v382 = vpop.permute.xlu0 %381
    %vm383 = vcmask 23552
    %s384 = scalar_lea.vmem %s1, 23
    %385 = vst.msk [vmem:[%s384] sm:$0x1] %vm383, %v382
    %s386 = scalar_lea.vmem %s1, 86
    %387 = vst.msk [vmem:[%s386] sm:$0x2] %vm383, %v382
    %v388 = vld [vmem:[#allocation0] sm:$0x3]
    %389 = vrot.lane.b32.xlu0 %v388, 56
    %v390 = vpop.permute.xlu0 %389
    %vm391 = vcmask 23552
    %s392 = scalar_lea.vmem %s1, 24
    %393 = vst.msk [vmem:[%s392] sm:$0x1] %vm391, %v390
    %s394 = scalar_lea.vmem %s1, 87
    %395 = vst.msk [vmem:[%s394] sm:$0x2] %vm391, %v390
    %v396 = vld [vmem:[#allocation0] sm:$0x3]
    %397 = vrot.lane.b32.xlu0 %v396, 53
    %v398 = vpop.permute.xlu0 %397
    %vm399 = vcmask 23552
    %s400 = scalar_lea.vmem %s1, 25
    %401 = vst.msk [vmem:[%s400] sm:$0x1] %vm399, %v398
    %s402 = scalar_lea.vmem %s1, 88
    %403 = vst.msk [vmem:[%s402] sm:$0x2] %vm399, %v398
    %v404 = vld [vmem:[#allocation0] sm:$0x3]
    %405 = vrot.lane.b32.xlu0 %v404, 50
    %v406 = vpop.permute.xlu0 %405
    %vm407 = vcmask 23552
    %s408 = scalar_lea.vmem %s1, 26
    %409 = vst.msk [vmem:[%s408] sm:$0x1] %vm407, %v406
    %s410 = scalar_lea.vmem %s1, 89
    %411 = vst.msk [vmem:[%s410] sm:$0x2] %vm407, %v406
    %v412 = vld [vmem:[#allocation0] sm:$0x3]
    %413 = vrot.lane.b32.xlu0 %v412, 47
    %v414 = vpop.permute.xlu0 %413
    %vm415 = vcmask 23552
    %s416 = scalar_lea.vmem %s1, 27
    %417 = vst.msk [vmem:[%s416] sm:$0x1] %vm415, %v414
    %s418 = scalar_lea.vmem %s1, 90
    %419 = vst.msk [vmem:[%s418] sm:$0x2] %vm415, %v414
    %v420 = vld [vmem:[#allocation0] sm:$0x3]
    %421 = vrot.lane.b32.xlu0 %v420, 44
    %v422 = vpop.permute.xlu0 %421
    %vm423 = vcmask 23552
    %s424 = scalar_lea.vmem %s1, 28
    %425 = vst.msk [vmem:[%s424] sm:$0x1] %vm423, %v422
    %s426 = scalar_lea.vmem %s1, 91
    %427 = vst.msk [vmem:[%s426] sm:$0x2] %vm423, %v422
    %v428 = vld [vmem:[#allocation0] sm:$0x3]
    %429 = vrot.lane.b32.xlu0 %v428, 41
    %v430 = vpop.permute.xlu0 %429
    %vm431 = vcmask 23552
    %s432 = scalar_lea.vmem %s1, 29
    %433 = vst.msk [vmem:[%s432] sm:$0x1] %vm431, %v430
    %s434 = scalar_lea.vmem %s1, 92
    %435 = vst.msk [vmem:[%s434] sm:$0x2] %vm431, %v430
    %v436 = vld [vmem:[#allocation0] sm:$0x3]
    %437 = vrot.lane.b32.xlu0 %v436, 38
    %v438 = vpop.permute.xlu0 %437
    %vm439 = vcmask 23552
    %s440 = scalar_lea.vmem %s1, 30
    %441 = vst.msk [vmem:[%s440] sm:$0x1] %vm439, %v438
    %s442 = scalar_lea.vmem %s1, 93
    %443 = vst.msk [vmem:[%s442] sm:$0x2] %vm439, %v438
    %v444 = vld [vmem:[#allocation0] sm:$0x3]
    %445 = vrot.lane.b32.xlu0 %v444, 35
    %v446 = vpop.permute.xlu0 %445
    %vm447 = vcmask 23552
    %s448 = scalar_lea.vmem %s1, 31
    %449 = vst.msk [vmem:[%s448] sm:$0x1] %vm447, %v446
    %s450 = scalar_lea.vmem %s1, 94
    %451 = vst.msk [vmem:[%s450] sm:$0x2] %vm447, %v446
    %v452 = vld [vmem:[#allocation0] sm:$0x3]
    %453 = vrot.lane.b32.xlu0 %v452, 32
    %v454 = vpop.permute.xlu0 %453
    %vm455 = vcmask 23552
    %s456 = scalar_lea.vmem %s1, 32
    %457 = vst.msk [vmem:[%s456] sm:$0x1] %vm455, %v454
    %s458 = scalar_lea.vmem %s1, 95
    %459 = vst.msk [vmem:[%s458] sm:$0x2] %vm455, %v454
    %v460 = vld [vmem:[#allocation0] sm:$0x3]
    %461 = vrot.lane.b32.xlu0 %v460, 29
    %v462 = vpop.permute.xlu0 %461
    %vm463 = vcmask 23552
    %s464 = scalar_lea.vmem %s1, 33
    %465 = vst.msk [vmem:[%s464] sm:$0x1] %vm463, %v462
    %s466 = scalar_lea.vmem %s1, 96
    %467 = vst.msk [vmem:[%s466] sm:$0x2] %vm463, %v462
    %v468 = vld [vmem:[#allocation0] sm:$0x3]
    %469 = vrot.lane.b32.xlu0 %v468, 26
    %v470 = vpop.permute.xlu0 %469
    %vm471 = vcmask 23552
    %s472 = scalar_lea.vmem %s1, 34
    %473 = vst.msk [vmem:[%s472] sm:$0x1] %vm471, %v470
    %s474 = scalar_lea.vmem %s1, 97
    %475 = vst.msk [vmem:[%s474] sm:$0x2] %vm471, %v470
    %v476 = vld [vmem:[#allocation0] sm:$0x3]
    %477 = vrot.lane.b32.xlu0 %v476, 23
    %v478 = vpop.permute.xlu0 %477
    %vm479 = vcmask 23552
    %s480 = scalar_lea.vmem %s1, 35
    %481 = vst.msk [vmem:[%s480] sm:$0x1] %vm479, %v478
    %s482 = scalar_lea.vmem %s1, 98
    %483 = vst.msk [vmem:[%s482] sm:$0x2] %vm479, %v478
    %v484 = vld [vmem:[#allocation0] sm:$0x3]
    %485 = vrot.lane.b32.xlu0 %v484, 20
    %v486 = vpop.permute.xlu0 %485
    %vm487 = vcmask 23552
    %s488 = scalar_lea.vmem %s1, 36
    %489 = vst.msk [vmem:[%s488] sm:$0x1] %vm487, %v486
    %s490 = scalar_lea.vmem %s1, 99
    %491 = vst.msk [vmem:[%s490] sm:$0x2] %vm487, %v486
    %v492 = vld [vmem:[#allocation0] sm:$0x3]
    %493 = vrot.lane.b32.xlu0 %v492, 17
    %v494 = vpop.permute.xlu0 %493
    %vm495 = vcmask 23552
    %s496 = scalar_lea.vmem %s1, 37
    %497 = vst.msk [vmem:[%s496] sm:$0x1] %vm495, %v494
    %s498 = scalar_lea.vmem %s1, 100
    %499 = vst.msk [vmem:[%s498] sm:$0x2] %vm495, %v494
    %v500 = vld [vmem:[#allocation0] sm:$0x3]
    %501 = vrot.lane.b32.xlu0 %v500, 14
    %v502 = vpop.permute.xlu0 %501
    %vm503 = vcmask 23552
    %s504 = scalar_lea.vmem %s1, 38
    %505 = vst.msk [vmem:[%s504] sm:$0x1] %vm503, %v502
    %s506 = scalar_lea.vmem %s1, 101
    %507 = vst.msk [vmem:[%s506] sm:$0x2] %vm503, %v502
    %v508 = vld [vmem:[#allocation0] sm:$0x3]
    %509 = vrot.lane.b32.xlu0 %v508, 11
    %v510 = vpop.permute.xlu0 %509
    %vm511 = vcmask 23552
    %s512 = scalar_lea.vmem %s1, 39
    %513 = vst.msk [vmem:[%s512] sm:$0x1] %vm511, %v510
    %s514 = scalar_lea.vmem %s1, 102
    %515 = vst.msk [vmem:[%s514] sm:$0x2] %vm511, %v510
    %v516 = vld [vmem:[#allocation0] sm:$0x3]
    %517 = vrot.lane.b32.xlu0 %v516, 8
    %v518 = vpop.permute.xlu0 %517
    %vm519 = vcmask 23552
    %s520 = scalar_lea.vmem %s1, 40
    %521 = vst.msk [vmem:[%s520] sm:$0x1] %vm519, %v518
    %s522 = scalar_lea.vmem %s1, 103
    %523 = vst.msk [vmem:[%s522] sm:$0x2] %vm519, %v518
    %v524 = vld [vmem:[#allocation0] sm:$0x3]
    %525 = vrot.lane.b32.xlu0 %v524, 5
    %v526 = vpop.permute.xlu0 %525
    %vm527 = vcmask 23552
    %s528 = scalar_lea.vmem %s1, 41
    %529 = vst.msk [vmem:[%s528] sm:$0x1] %vm527, %v526
    %s530 = scalar_lea.vmem %s1, 104
    %531 = vst.msk [vmem:[%s530] sm:$0x2] %vm527, %v526
    %v532 = vld [vmem:[#allocation0] sm:$0x3]
    %s533 = scalar_lea.vmem [#allocation0], 8
    %v534 = vld [vmem:[%s533] sm:$0x3]
    %vm535 = vcmask 1031168
    %v536 = vsel %vm535, %v534, %v532
    %537 = vrot.lane.b32.xlu0 %v536, 2
    %v538 = vpop.permute.xlu0 %537
    %vm539 = vcmask 15360
    %s540 = scalar_lea.vmem %s1, 42
    %541 = vst.msk [vmem:[%s540] sm:$0x1] %vm539, %v538
    %s542 = scalar_lea.vmem %s1, 105
    %543 = vst.msk [vmem:[%s542] sm:$0x2] %vm539, %v538
    %vm544 = vcmask 23568
    %s545 = scalar_lea.vmem %s1, 42
    %546 = vst.msk [vmem:[%s545] sm:$0x1] %vm544, %v538
    %s547 = scalar_lea.vmem %s1, 105
    %548 = vst.msk [vmem:[%s547] sm:$0x2] %vm544, %v538

// kernel: deform_gcn_forward.1
$region0: #{deform_gcn_forward.1}
  #allocation0 [shape = 'u32[]', space=smem, size = 0x4, offset = 0x4, fixed_abs, tag = 'smem constant byte address 0x4 - core index']
  #allocation1 [shape = 'u32[72,128]{1,0:T(1,128)}', space=vmem, size = 0x9000, scoped, tag = 'internal scratch']
  %s0 = inlined_call_operand.vmem [shape: f32[2,64,128], index: 0, kind: input, shape index: {}]
  %s1 = inlined_call_operand.vmem [shape: f32[2,1,128], index: 1, kind: input, shape index: {}]
  %s2 = inlined_call_operand.vmem [shape: f32[64,64], index: 2, kind: input, shape index: {}]
  %s3 = inlined_call_operand.vmem [shape: f32[128,128], index: 3, kind: input, shape index: {}]
  %s4 = inlined_call_operand.vmem [shape: f32[128,128], index: 4, kind: input, shape index: {}]
  %s5 = inlined_call_operand.vmem [shape: f32[5,128,128], index: 5, kind: input, shape index: {}]
  %s6 = inlined_call_operand.vmem [shape: f32[6,1,128], index: 6, kind: input, shape index: {}]
  %s7 = inlined_call_operand.vmem [shape: f32[3,256,64], index: 7, kind: input, shape index: {}]
  %s8 = inlined_call_operand.vmem [shape: f32[256,1], index: 8, kind: input, shape index: {}]
  %s9 = inlined_call_operand.vmem [shape: f32[2,256,1], index: 9, kind: output, shape index: {}]
  %s10 = sld [smem:[#allocation0]]
  $region69: #{deform_gcn_forward.1} parent=0
    _
  %s12 = ssub.s32 1, %s10
  %s13 = scalar_select 0, %s12, %s10
  loop: start=0, step=1, limit=4
  $region2: #{deform_gcn_forward.1} parent=0 // loop_pre_header
    _
  $region3: #{deform_gcn_forward.1} parent=0 // loop_header
    %s15 = sphi 0, %s19
    %p16 = scmp.ge.s32.totalorder %s15, 4
    %s25 = sphi 0, %s27
    %s28 = sphi 0, %s25
    %s29 = sphi 0, %s28
    %s45 = sphi 0, %s29
    %s51 = sphi 0, %s53
    %s54 = sphi 0, %s51
    %s55 = sphi 0, %s54
    %s71 = sphi 0, %s55
    %s75 = sphi 0, %s75
    %s77 = sphi 0, %s75
    %s78 = sphi 0, %s77
    %s92 = sphi 0, %s78
    %s96 = sphi 0, %s96
    %s98 = sphi 0, %s96
    %s99 = sphi 0, %s98
    %s113 = sphi 0, %s99
    %s117 = sphi 0, %s117
    %s119 = sphi 0, %s117
    %s120 = sphi 0, %s119
    %s134 = sphi 0, %s120
    %s138 = sphi 0, %s138
    %s140 = sphi 0, %s138
    %s141 = sphi 0, %s140
    %s155 = sphi 0, %s141
    %s159 = sphi 0, %s159
    %s161 = sphi 0, %s159
    %s162 = sphi 0, %s161
    %s176 = sphi 0, %s162
    %s180 = sphi 0, %s180
    %s182 = sphi 0, %s180
    %s183 = sphi 0, %s182
    %s197 = sphi 0, %s183
    %s201 = sphi 0, %s201
    %s203 = sphi 0, %s201
    %s204 = sphi 0, %s203
    %s218 = sphi 0, %s204
    %s224 = sphi 0, %s226
    %s227 = sphi 0, %s224
    %s228 = sphi 0, %s227
    %s244 = sphi 0, %s228
  $region4: #{deform_gcn_forward.1} parent=0 // loop_header_branch
    %18 = sbr.rel (%p16) target = $region8
  $region5: #{deform_gcn_forward.1} parent=0 // loop_body
    %s20 = ssub.s32 %s15, 1
    %s21 = ssub.s32 %s15, 2
    %s22 = sadd.s32 %s15, 1
    %s23 = ssub.s32 %s15, %s22
    %p24 = scmp.eq.s32.totalorder %s23, 0
    %s26 = sadd.s32 %s25, 1
    %s27 = scalar_select %p24, %s25, %s26
    %p30 = pneg %p24
    %p31 = scmp.eq.s32.totalorder %s15, 1
    %p32 = por %p30, %p31
    %p33 = scmp.ne.s32.totalorder %s25, %s28
    %p34 = scmp.eq.s32.totalorder %s15, 0
    %p35 = por %p33, %p34
    %p36 = scmp.ne.s32.totalorder %s25, %s28
    %p37 = scmp.eq.s32.totalorder %s20, 1
    %p38 = por %p36, %p37
    %p39 = scmp.ne.s32.totalorder %s28, %s29
    %p40 = scmp.eq.s32.totalorder %s20, 0
    %p41 = por %p39, %p40
    %p42 = scmp.ne.s32.totalorder %s28, %s29
    %p43 = scmp.eq.s32.totalorder %s21, 1
    %p44 = por %p42, %p43
    %p46 = scmp.ne.s32.totalorder %s29, %s45
    %p47 = scmp.eq.s32.totalorder %s21, 0
    %p48 = por %p46, %p47
    %s49 = ssub.s32 %s15, %s22
    %p50 = scmp.eq.s32.totalorder %s49, 0
    %s52 = sadd.s32 %s51, 1
    %s53 = scalar_select %p50, %s51, %s52
    %p56 = pneg %p50
    %p57 = scmp.eq.s32.totalorder %s15, 1
    %p58 = por %p56, %p57
    %p59 = scmp.ne.s32.totalorder %s51, %s54
    %p60 = scmp.eq.s32.totalorder %s15, 0
    %p61 = por %p59, %p60
    %p62 = scmp.ne.s32.totalorder %s51, %s54
    %p63 = scmp.eq.s32.totalorder %s20, 1
    %p64 = por %p62, %p63
    %p65 = scmp.ne.s32.totalorder %s54, %s55
    %p66 = scmp.eq.s32.totalorder %s20, 0
    %p67 = por %p65, %p66
    %p68 = scmp.ne.s32.totalorder %s54, %s55
    %p69 = scmp.eq.s32.totalorder %s21, 1
    %p70 = por %p68, %p69
    %p72 = scmp.ne.s32.totalorder %s55, %s71
    %p73 = scmp.eq.s32.totalorder %s21, 0
    %p74 = por %p72, %p73
    %s76 = sadd.s32 %s75, 1
    %p79 = scmp.eq.s32.totalorder %s15, 1
    %p80 = scmp.ne.s32.totalorder %s75, %s77
    %p81 = scmp.eq.s32.totalorder %s15, 0
    %p82 = por %p80, %p81
    %p83 = scmp.ne.s32.totalorder %s75, %s77
    %p84 = scmp.eq.s32.totalorder %s20, 1
    %p85 = por %p83, %p84
    %p86 = scmp.ne.s32.totalorder %s77, %s78
    %p87 = scmp.eq.s32.totalorder %s20, 0
    %p88 = por %p86, %p87
    %p89 = scmp.ne.s32.totalorder %s77, %s78
    %p90 = scmp.eq.s32.totalorder %s21, 1
    %p91 = por %p89, %p90
    %p93 = scmp.ne.s32.totalorder %s78, %s92
    %p94 = scmp.eq.s32.totalorder %s21, 0
    %p95 = por %p93, %p94
    %s97 = sadd.s32 %s96, 1
    %p100 = scmp.eq.s32.totalorder %s15, 1
    %p101 = scmp.ne.s32.totalorder %s96, %s98
    %p102 = scmp.eq.s32.totalorder %s15, 0
    %p103 = por %p101, %p102
    %p104 = scmp.ne.s32.totalorder %s96, %s98
    %p105 = scmp.eq.s32.totalorder %s20, 1
    %p106 = por %p104, %p105
    %p107 = scmp.ne.s32.totalorder %s98, %s99
    %p108 = scmp.eq.s32.totalorder %s20, 0
    %p109 = por %p107, %p108
    %p110 = scmp.ne.s32.totalorder %s98, %s99
    %p111 = scmp.eq.s32.totalorder %s21, 1
    %p112 = por %p110, %p111
    %p114 = scmp.ne.s32.totalorder %s99, %s113
    %p115 = scmp.eq.s32.totalorder %s21, 0
    %p116 = por %p114, %p115
    %s118 = sadd.s32 %s117, 1
    %p121 = scmp.eq.s32.totalorder %s15, 1
    %p122 = scmp.ne.s32.totalorder %s117, %s119
    %p123 = scmp.eq.s32.totalorder %s15, 0
    %p124 = por %p122, %p123
    %p125 = scmp.ne.s32.totalorder %s117, %s119
    %p126 = scmp.eq.s32.totalorder %s20, 1
    %p127 = por %p125, %p126
    %p128 = scmp.ne.s32.totalorder %s119, %s120
    %p129 = scmp.eq.s32.totalorder %s20, 0
    %p130 = por %p128, %p129
    %p131 = scmp.ne.s32.totalorder %s119, %s120
    %p132 = scmp.eq.s32.totalorder %s21, 1
    %p133 = por %p131, %p132
    %p135 = scmp.ne.s32.totalorder %s120, %s134
    %p136 = scmp.eq.s32.totalorder %s21, 0
    %p137 = por %p135, %p136
    %s139 = sadd.s32 %s138, 1
    %p142 = scmp.eq.s32.totalorder %s15, 1
    %p143 = scmp.ne.s32.totalorder %s138, %s140
    %p144 = scmp.eq.s32.totalorder %s15, 0
    %p145 = por %p143, %p144
    %p146 = scmp.ne.s32.totalorder %s138, %s140
    %p147 = scmp.eq.s32.totalorder %s20, 1
    %p148 = por %p146, %p147
    %p149 = scmp.ne.s32.totalorder %s140, %s141
    %p150 = scmp.eq.s32.totalorder %s20, 0
    %p151 = por %p149, %p150
    %p152 = scmp.ne.s32.totalorder %s140, %s141
    %p153 = scmp.eq.s32.totalorder %s21, 1
    %p154 = por %p152, %p153
    %p156 = scmp.ne.s32.totalorder %s141, %s155
    %p157 = scmp.eq.s32.totalorder %s21, 0
    %p158 = por %p156, %p157
    %s160 = sadd.s32 %s159, 1
    %p163 = scmp.eq.s32.totalorder %s15, 1
    %p164 = scmp.ne.s32.totalorder %s159, %s161
    %p165 = scmp.eq.s32.totalorder %s15, 0
    %p166 = por %p164, %p165
    %p167 = scmp.ne.s32.totalorder %s159, %s161
    %p168 = scmp.eq.s32.totalorder %s20, 1
    %p169 = por %p167, %p168
    %p170 = scmp.ne.s32.totalorder %s161, %s162
    %p171 = scmp.eq.s32.totalorder %s20, 0
    %p172 = por %p170, %p171
    %p173 = scmp.ne.s32.totalorder %s161, %s162
    %p174 = scmp.eq.s32.totalorder %s21, 1
    %p175 = por %p173, %p174
    %p177 = scmp.ne.s32.totalorder %s162, %s176
    %p178 = scmp.eq.s32.totalorder %s21, 0
    %p179 = por %p177, %p178
    %s181 = sadd.s32 %s180, 1
    %p184 = scmp.eq.s32.totalorder %s15, 1
    %p185 = scmp.ne.s32.totalorder %s180, %s182
    %p186 = scmp.eq.s32.totalorder %s15, 0
    %p187 = por %p185, %p186
    %p188 = scmp.ne.s32.totalorder %s180, %s182
    %p189 = scmp.eq.s32.totalorder %s20, 1
    %p190 = por %p188, %p189
    %p191 = scmp.ne.s32.totalorder %s182, %s183
    %p192 = scmp.eq.s32.totalorder %s20, 0
    %p193 = por %p191, %p192
    %p194 = scmp.ne.s32.totalorder %s182, %s183
    %p195 = scmp.eq.s32.totalorder %s21, 1
    %p196 = por %p194, %p195
    %p198 = scmp.ne.s32.totalorder %s183, %s197
    %p199 = scmp.eq.s32.totalorder %s21, 0
    %p200 = por %p198, %p199
    %s202 = sadd.s32 %s201, 1
    %p205 = scmp.eq.s32.totalorder %s15, 1
    %p206 = scmp.ne.s32.totalorder %s201, %s203
    %p207 = scmp.eq.s32.totalorder %s15, 0
    %p208 = por %p206, %p207
    %p209 = scmp.ne.s32.totalorder %s201, %s203
    %p210 = scmp.eq.s32.totalorder %s20, 1
    %p211 = por %p209, %p210
    %p212 = scmp.ne.s32.totalorder %s203, %s204
    %p213 = scmp.eq.s32.totalorder %s20, 0
    %p214 = por %p212, %p213
    %p215 = scmp.ne.s32.totalorder %s203, %s204
    %p216 = scmp.eq.s32.totalorder %s21, 1
    %p217 = por %p215, %p216
    %p219 = scmp.ne.s32.totalorder %s204, %s218
    %p220 = scmp.eq.s32.totalorder %s21, 0
    %p221 = por %p219, %p220
    %s222 = ssub.s32 %s15, %s22
    %p223 = scmp.eq.s32.totalorder %s222, 0
    %s225 = sadd.s32 %s224, 1
    %s226 = scalar_select %p223, %s224, %s225
    %p229 = pneg %p223
    %p230 = scmp.eq.s32.totalorder %s15, 1
    %p231 = por %p229, %p230
    %p232 = scmp.ne.s32.totalorder %s224, %s227
    %p233 = scmp.eq.s32.totalorder %s15, 0
    %p234 = por %p232, %p233
    %p235 = scmp.ne.s32.totalorder %s224, %s227
    %p236 = scmp.eq.s32.totalorder %s20, 1
    %p237 = por %p235, %p236
    %p238 = scmp.ne.s32.totalorder %s227, %s228
    %p239 = scmp.eq.s32.totalorder %s20, 0
    %p240 = por %p238, %p239
    %p241 = scmp.ne.s32.totalorder %s227, %s228
    %p242 = scmp.eq.s32.totalorder %s21, 1
    %p243 = por %p241, %p242
    %p245 = scmp.ne.s32.totalorder %s228, %s244
    %p246 = scmp.eq.s32.totalorder %s21, 0
    %p247 = por %p245, %p246
    %p248 = scmp.le.s32.totalorder 1, %s15
    %p249 = scmp.lt.s32.totalorder %s15, 3
    %p250 = pnand %p248, %p249
    %p251 = pneg %p250
    // Predicated region
    $region9: #{deform_gcn_forward.1} parent=5 // pred_check
      _
    $region10: #{deform_gcn_forward.1} parent=5 // pred_check_branch
      %253 = sbr.rel (%p250) target = $region12
    $region11: #{deform_gcn_forward.1} parent=5 // pred_region
      %s254 = ssub.s32 %s15, 1
      // Predicated region
      $region13: #{deform_gcn_forward.1} parent=11 // pred_check
        %p255 = pneg %p88
      $region14: #{deform_gcn_forward.1} parent=11 // pred_check_branch
        %257 = sbr.rel (%p255) target = $region16
      $region15: #{deform_gcn_forward.1} parent=11 // pred_region
        _
      $region16: #{deform_gcn_forward.1} parent=11 // pred_fallthru
        _
      // Predicated region
      $region17: #{deform_gcn_forward.1} parent=11 // pred_check
        %p258 = pneg %p109
      $region18: #{deform_gcn_forward.1} parent=11 // pred_check_branch
        %260 = sbr.rel (%p258) target = $region20
      $region19: #{deform_gcn_forward.1} parent=11 // pred_region
        _
      $region20: #{deform_gcn_forward.1} parent=11 // pred_fallthru
        _
      // Predicated region
      $region21: #{deform_gcn_forward.1} parent=11 // pred_check
        %p261 = pneg %p130
      $region22: #{deform_gcn_forward.1} parent=11 // pred_check_branch
        %263 = sbr.rel (%p261) target = $region24
      $region23: #{deform_gcn_forward.1} parent=11 // pred_region
        _
      $region24: #{deform_gcn_forward.1} parent=11 // pred_fallthru
        _
      // Predicated region
      $region25: #{deform_gcn_forward.1} parent=11 // pred_check
        %p264 = pneg %p151
      $region26: #{deform_gcn_forward.1} parent=11 // pred_check_branch
        %266 = sbr.rel (%p264) target = $region28
      $region27: #{deform_gcn_forward.1} parent=11 // pred_region
        _
      $region28: #{deform_gcn_forward.1} parent=11 // pred_fallthru
        _
      // Predicated region
      $region29: #{deform_gcn_forward.1} parent=11 // pred_check
        %p267 = pneg %p172
      $region30: #{deform_gcn_forward.1} parent=11 // pred_check_branch
        %269 = sbr.rel (%p267) target = $region32
      $region31: #{deform_gcn_forward.1} parent=11 // pred_region
        _
      $region32: #{deform_gcn_forward.1} parent=11 // pred_fallthru
        _
      // Predicated region
      $region33: #{deform_gcn_forward.1} parent=11 // pred_check
        %p270 = pneg %p193
      $region34: #{deform_gcn_forward.1} parent=11 // pred_check_branch
        %272 = sbr.rel (%p270) target = $region36
      $region35: #{deform_gcn_forward.1} parent=11 // pred_region
        _
      $region36: #{deform_gcn_forward.1} parent=11 // pred_fallthru
        _
      // Predicated region
      $region37: #{deform_gcn_forward.1} parent=11 // pred_check
        %p273 = pneg %p214
      $region38: #{deform_gcn_forward.1} parent=11 // pred_check_branch
        %275 = sbr.rel (%p273) target = $region40
      $region39: #{deform_gcn_forward.1} parent=11 // pred_region
        _
      $region40: #{deform_gcn_forward.1} parent=11 // pred_fallthru
        _
    $region12: #{deform_gcn_forward.1} parent=5 // pred_fallthru
      _
    %p276 = scmp.lt.s32.totalorder %s15, 2
    // Predicated region
    $region41: #{deform_gcn_forward.1} parent=5 // pred_check
      %p277 = pneg %p276
    $region42: #{deform_gcn_forward.1} parent=5 // pred_check_branch
      %279 = sbr.rel (%p277) target = $region44
    $region43: #{deform_gcn_forward.1} parent=5 // pred_region
      // Predicated region
      $region45: #{deform_gcn_forward.1} parent=43 // pred_check
        %p280 = pneg %p35
      $region46: #{deform_gcn_forward.1} parent=43 // pred_check_branch
        %282 = sbr.rel (%p280) target = $region48
      $region47: #{deform_gcn_forward.1} parent=43 // pred_region
        %p283 = scmp.lt.s32.totalorder %s15, 1
        %s284 = scalar_select %p283, %s15, 1
        %s285 = smul.addr %s284, 8
        %s286 = smul.addr %s285, 8
        %s287 = scalar_lea.vmem %s0, %s286
      $region48: #{deform_gcn_forward.1} parent=43 // pred_fallthru
        _
      // Predicated region
      $region49: #{deform_gcn_forward.1} parent=43 // pred_check
        %p288 = pneg %p61
      $region50: #{deform_gcn_forward.1} parent=43 // pred_check_branch
        %290 = sbr.rel (%p288) target = $region52
      $region51: #{deform_gcn_forward.1} parent=43 // pred_region
        %p291 = scmp.lt.s32.totalorder %s15, 1
        %s292 = scalar_select %p291, %s15, 1
        %s293 = scalar_lea.vmem %s1, %s292
      $region52: #{deform_gcn_forward.1} parent=43 // pred_fallthru
        _
    $region44: #{deform_gcn_forward.1} parent=5 // pred_fallthru
      _
    %p294 = scmp.le.s32.totalorder 1, %s15
    %p295 = scmp.lt.s32.totalorder %s15, 3
    %p296 = pnand %p294, %p295
    %p297 = pneg %p296
    // Predicated region
    $region53: #{deform_gcn_forward.1} parent=5 // pred_check
      _
    $region54: #{deform_gcn_forward.1} parent=5 // pred_check_branch
      %299 = sbr.rel (%p296) target = $region56
    $region55: #{deform_gcn_forward.1} parent=5 // pred_region
      %s300 = ssub.s32 %s15, 1
      %p301 = scmp.lt.s32.totalorder %s20, 1
      %s302 = scalar_select %p301, %s20, 1
      %s303 = smul.addr %s302, 8
      %s304 = smul.addr %s303, 8
      %s305 = scalar_lea.vmem %s0, %s304
      %p306 = pneg %p41
      %p307 = pneg %p38
      %p308 = scmp.lt.s32.totalorder %s20, 1
      %s309 = scalar_select %p308, %s20, 1
      %s310 = scalar_lea.vmem %s1, %s309
      %p311 = pneg %p67
      %p312 = pneg %p64
      %p313 = pneg %p88
      %p314 = pneg %p85
      %p315 = pneg %p109
      %p316 = pneg %p106
      %p317 = pneg %p130
      %p318 = pneg %p127
      %p319 = pneg %p151
      %p320 = pneg %p148
      %p321 = pneg %p172
      %p322 = pneg %p169
      %p323 = pneg %p193
      %p324 = pneg %p190
      %p325 = pneg %p214
      %p326 = pneg %p211
      %p327 = pneg %p240
      %p328 = pneg %p237
      %p329 = scmp.lt.s32.totalorder %s20, 1
      %s330 = scalar_select %p329, %s20, 1
      %s331 = smul.addr %s330, 32
      %s332 = smul.addr %s331, 8
      %s333 = scalar_lea.vmem %s9, %s332
      %p334 = scmp.lt.s32.totalorder %s20, 1
      %s335 = scalar_select %p334, %s20, 1
      %s336 = smul.addr %s335, 8
      %s337 = smul.addr %s336, 8
      %s338 = scalar_lea.vmem %s0, %s337
      %p339 = scmp.lt.s32.totalorder %s20, 1
      %s340 = scalar_select %p339, %s20, 1
      %s341 = scalar_lea.vmem %s1, %s340
      %p342 = scmp.lt.s32.totalorder %s20, 1
      %s343 = scalar_select %p342, %s20, 1
      %s344 = smul.addr %s343, 32
      %s345 = smul.addr %s344, 8
      %s346 = scalar_lea.vmem %s9, %s345
      %v347 = vld [vmem:[%s2] sm:$0xff]
      %v348 = vld [vmem:[%s2 + $0x8] sm:$0xff]
      %v349 = vld [vmem:[%s2 + $0x10] sm:$0xff]
      %v350 = vld [vmem:[%s2 + $0x18] sm:$0xff]
      %v351 = vld [vmem:[%s2 + $0x20] sm:$0xff]
      %v352 = vld [vmem:[%s2 + $0x28] sm:$0xff]
      %v353 = vld [vmem:[%s2 + $0x30] sm:$0xff]
      %v354 = vld [vmem:[%s2 + $0x38] sm:$0xff]
      %v355 = vld [vmem:[%s338] sm:$0xff]
      %v356 = vld [vmem:[%s338 + $0x8] sm:$0xff]
      %v357 = vld [vmem:[%s338 + $0x10] sm:$0xff]
      %v358 = vld [vmem:[%s338 + $0x18] sm:$0xff]
      %v359 = vld [vmem:[%s338 + $0x20] sm:$0xff]
      %v360 = vld [vmem:[%s338 + $0x28] sm:$0xff]
      %v361 = vld [vmem:[%s338 + $0x30] sm:$0xff]
      %v362 = vld [vmem:[%s338 + $0x38] sm:$0xff]
      %v363 = vld [vmem:[%s3] sm:$0xff]
      %v364 = vld [vmem:[%s3 + $0x8] sm:$0xff]
      %v365 = vld [vmem:[%s3 + $0x10] sm:$0xff]
      %v366 = vld [vmem:[%s3 + $0x18] sm:$0xff]
      %v367 = vld [vmem:[%s3 + $0x20] sm:$0xff]
      %v368 = vld [vmem:[%s3 + $0x28] sm:$0xff]
      %v369 = vld [vmem:[%s3 + $0x30] sm:$0xff]
      %v370 = vld [vmem:[%s3 + $0x38] sm:$0xff]
      %v371 = vld [vmem:[%s3 + $0x40] sm:$0xff]
      %v372 = vld [vmem:[%s3 + $0x48] sm:$0xff]
      %v373 = vld [vmem:[%s3 + $0x50] sm:$0xff]
      %v374 = vld [vmem:[%s3 + $0x58] sm:$0xff]
      %v375 = vld [vmem:[%s3 + $0x60] sm:$0xff]
      %v376 = vld [vmem:[%s3 + $0x68] sm:$0xff]
      %v377 = vld [vmem:[%s3 + $0x70] sm:$0xff]
      %v378 = vld [vmem:[%s3 + $0x78] sm:$0xff]
      %v379 = vld [vmem:[%s341] sm:$0x1]
      %v380 = vld [vmem:[%s4] sm:$0xff]
      %v381 = vld [vmem:[%s4 + $0x8] sm:$0xff]
      %v382 = vld [vmem:[%s4 + $0x10] sm:$0xff]
      %v383 = vld [vmem:[%s4 + $0x18] sm:$0xff]
      %v384 = vld [vmem:[%s4 + $0x20] sm:$0xff]
      %v385 = vld [vmem:[%s4 + $0x28] sm:$0xff]
      %v386 = vld [vmem:[%s4 + $0x30] sm:$0xff]
      %v387 = vld [vmem:[%s4 + $0x38] sm:$0xff]
      %v388 = vld [vmem:[%s4 + $0x40] sm:$0xff]
      %v389 = vld [vmem:[%s4 + $0x48] sm:$0xff]
      %v390 = vld [vmem:[%s4 + $0x50] sm:$0xff]
      %v391 = vld [vmem:[%s4 + $0x58] sm:$0xff]
      %v392 = vld [vmem:[%s4 + $0x60] sm:$0xff]
      %v393 = vld [vmem:[%s4 + $0x68] sm:$0xff]
      %v394 = vld [vmem:[%s4 + $0x70] sm:$0xff]
      %v395 = vld [vmem:[%s4 + $0x78] sm:$0xff]
      %396 = vmatpush.msra.mxu0 %v395
      %397 = vmatpush.msra.mxu0 %v394
      %398 = vmatpush.msra.mxu0 %v393
      %399 = vmatpush.msra.mxu0 %v392
      %400 = vmatpush.msra.mxu0 %v391
      %401 = vmatpush.msra.mxu0 %v390
      %402 = vmatpush.msra.mxu0 %v389
      %403 = vmatpush.msra.mxu0 %v388
      %404 = vmatpush.msra.mxu0 %v387
      %405 = vmatpush.msra.mxu0 %v386
      %406 = vmatpush.msra.mxu0 %v385
      %407 = vmatpush.msra.mxu0 %v384
      %408 = vmatpush.msra.mxu0 %v383
      %409 = vmatpush.msra.mxu0 %v382
      %410 = vmatpush.msra.mxu0 %v381
      %411 = vmatpush.msra.mxu0 %v380
      %412 = vmatmul.f32.gmra.mxu0 %v379
      %v413 = vpop.f32.mrf.mxu0
      %v414 = vadd.f32 0.0, %v413
      %415 = vdwg.mxu0
      %v416 = vperm.slane %v414, 0
      %417 = vmatpush.msra.mxu0 %v378
      %418 = vmatpush.msra.mxu0 %v377
      %419 = vmatpush.msra.mxu0 %v376
      %420 = vmatpush.msra.mxu0 %v375
      %421 = vmatpush.msra.mxu0 %v374
      %422 = vmatpush.msra.mxu0 %v373
      %423 = vmatpush.msra.mxu0 %v372
      %424 = vmatpush.msra.mxu0 %v371
      %425 = vmatpush.msra.mxu0 %v370
      %426 = vmatpush.msra.mxu0 %v369
      %427 = vmatpush.msra.mxu0 %v368
      %428 = vmatpush.msra.mxu0 %v367
      %429 = vmatpush.msra.mxu0 %v366
      %430 = vmatpush.msra.mxu0 %v365
      %431 = vmatpush.msra.mxu0 %v364
      %432 = vmatpush.msra.mxu0 %v363
      %433 = vmatmul.f32.gmra.mxu0 %v355
      %v434 = vpop.f32.mrf.mxu0
      %v435 = vadd.f32 %v416, %v434
      %436 = vmatmul.f32.gmra.mxu0 %v356
      %v437 = vpop.f32.mrf.mxu0
      %v438 = vadd.f32 %v416, %v437
      %439 = vmatmul.f32.gmra.mxu0 %v357
      %v440 = vpop.f32.mrf.mxu0
      %v441 = vadd.f32 %v416, %v440
      %442 = vmatmul.f32.gmra.mxu0 %v358
      %v443 = vpop.f32.mrf.mxu0
      %v444 = vadd.f32 %v416, %v443
      %445 = vmatmul.f32.gmra.mxu0 %v359
      %v446 = vpop.f32.mrf.mxu0
      %v447 = vadd.f32 %v416, %v446
      %448 = vmatmul.f32.gmra.mxu0 %v360
      %v449 = vpop.f32.mrf.mxu0
      %v450 = vadd.f32 %v416, %v449
      %451 = vmatmul.f32.gmra.mxu0 %v361
      %v452 = vpop.f32.mrf.mxu0
      %v453 = vadd.f32 %v416, %v452
      %454 = vmatmul.f32.gmra.mxu0 %v362
      %v455 = vpop.f32.mrf.mxu0
      %v456 = vadd.f32 %v416, %v455
      %457 = vdwg.mxu0
      %v458 = vld [vmem:[%s6] sm:$0x1]
      %v460 = vperm.slane %v458, 0
      %vm462 = vcmask 523264
      %v464 = vsel %vm462, %v347, 0
      %v467 = vsel %vm462, %v348, 0
      %v470 = vsel %vm462, %v349, 0
      %v473 = vsel %vm462, %v350, 0
      %v476 = vsel %vm462, %v351, 0
      %v479 = vsel %vm462, %v352, 0
      %v482 = vsel %vm462, %v353, 0
      %v485 = vsel %vm462, %v354, 0
      %487 = vmatpush.msra.mxu0 0.0
      %488 = vmatpush.msra.mxu0 0.0
      %489 = vmatpush.msra.mxu0 0.0
      %490 = vmatpush.msra.mxu0 0.0
      %491 = vmatpush.msra.mxu0 0.0
      %492 = vmatpush.msra.mxu0 0.0
      %493 = vmatpush.msra.mxu0 0.0
      %494 = vmatpush.msra.mxu0 0.0
      %495 = vmatpush.msra.mxu0 %v456
      %496 = vmatpush.msra.mxu0 %v453
      %497 = vmatpush.msra.mxu0 %v450
      %498 = vmatpush.msra.mxu0 %v447
      %499 = vmatpush.msra.mxu0 %v444
      %500 = vmatpush.msra.mxu0 %v441
      %501 = vmatpush.msra.mxu0 %v438
      %502 = vmatpush.msra.mxu0 %v435
      %503 = vmatmul.f32.gmra.mxu0 %v464
      %v504 = vpop.f32.mrf.mxu0
      %v505 = vadd.f32 %v460, %v504
      %506 = vmatmul.f32.gmra.mxu0 %v467
      %v507 = vpop.f32.mrf.mxu0
      %v508 = vadd.f32 %v460, %v507
      %509 = vmatmul.f32.gmra.mxu0 %v470
      %v510 = vpop.f32.mrf.mxu0
      %v511 = vadd.f32 %v460, %v510
      %512 = vmatmul.f32.gmra.mxu0 %v473
      %v513 = vpop.f32.mrf.mxu0
      %v514 = vadd.f32 %v460, %v513
      %515 = vmatmul.f32.gmra.mxu0 %v476
      %v516 = vpop.f32.mrf.mxu0
      %v517 = vadd.f32 %v460, %v516
      %518 = vmatmul.f32.gmra.mxu0 %v479
      %v519 = vpop.f32.mrf.mxu0
      %v520 = vadd.f32 %v460, %v519
      %521 = vmatmul.f32.gmra.mxu0 %v482
      %v522 = vpop.f32.mrf.mxu0
      %v523 = vadd.f32 %v460, %v522
      %524 = vmatmul.f32.gmra.mxu0 %v485
      %v525 = vpop.f32.mrf.mxu0
      %v526 = vadd.f32 %v460, %v525
      %527 = vdwg.mxu0
      %v528 = vld [vmem:[%s5] sm:$0xff]
      %v529 = vld [vmem:[%s5 + $0x8] sm:$0xff]
      %v530 = vld [vmem:[%s5 + $0x10] sm:$0xff]
      %v531 = vld [vmem:[%s5 + $0x18] sm:$0xff]
      %v532 = vld [vmem:[%s5 + $0x20] sm:$0xff]
      %v533 = vld [vmem:[%s5 + $0x28] sm:$0xff]
      %v534 = vld [vmem:[%s5 + $0x30] sm:$0xff]
      %v535 = vld [vmem:[%s5 + $0x38] sm:$0xff]
      %v536 = vld [vmem:[%s5 + $0x40] sm:$0xff]
      %v537 = vld [vmem:[%s5 + $0x48] sm:$0xff]
      %v538 = vld [vmem:[%s5 + $0x50] sm:$0xff]
      %v539 = vld [vmem:[%s5 + $0x58] sm:$0xff]
      %v540 = vld [vmem:[%s5 + $0x60] sm:$0xff]
      %v541 = vld [vmem:[%s5 + $0x68] sm:$0xff]
      %v542 = vld [vmem:[%s5 + $0x70] sm:$0xff]
      %v543 = vld [vmem:[%s5 + $0x78] sm:$0xff]
      %544 = vmatpush.msra.mxu0 %v543
      %545 = vmatpush.msra.mxu0 %v542
      %546 = vmatpush.msra.mxu0 %v541
      %547 = vmatpush.msra.mxu0 %v540
      %548 = vmatpush.msra.mxu0 %v539
      %549 = vmatpush.msra.mxu0 %v538
      %550 = vmatpush.msra.mxu0 %v537
      %551 = vmatpush.msra.mxu0 %v536
      %552 = vmatpush.msra.mxu0 %v535
      %553 = vmatpush.msra.mxu0 %v534
      %554 = vmatpush.msra.mxu0 %v533
      %555 = vmatpush.msra.mxu0 %v532
      %556 = vmatpush.msra.mxu0 %v531
      %557 = vmatpush.msra.mxu0 %v530
      %558 = vmatpush.msra.mxu0 %v529
      %559 = vmatpush.msra.mxu0 %v528
      %560 = vmatmul.f32.gmra.mxu0 %v505
      %v561 = vpop.f32.mrf.mxu0
      %v562 = vadd.f32 0.0, %v561
      %563 = vmatmul.f32.gmra.mxu0 %v508
      %v564 = vpop.f32.mrf.mxu0
      %v565 = vadd.f32 0.0, %v564
      %566 = vmatmul.f32.gmra.mxu0 %v511
      %v567 = vpop.f32.mrf.mxu0
      %v568 = vadd.f32 0.0, %v567
      %569 = vmatmul.f32.gmra.mxu0 %v514
      %v570 = vpop.f32.mrf.mxu0
      %v571 = vadd.f32 0.0, %v570
      %572 = vmatmul.f32.gmra.mxu0 %v517
      %v573 = vpop.f32.mrf.mxu0
      %v574 = vadd.f32 0.0, %v573
      %575 = vmatmul.f32.gmra.mxu0 %v520
      %v576 = vpop.f32.mrf.mxu0
      %v577 = vadd.f32 0.0, %v576
      %578 = vmatmul.f32.gmra.mxu0 %v523
      %v579 = vpop.f32.mrf.mxu0
      %v580 = vadd.f32 0.0, %v579
      %581 = vmatmul.f32.gmra.mxu0 %v526
      %v582 = vpop.f32.mrf.mxu0
      %v583 = vadd.f32 0.0, %v582
      %584 = vdwg.mxu0
      %s585 = scalar_lea.vmem %s6, 1
      %v586 = vld [vmem:[%s585] sm:$0x1]
      %v588 = vperm.slane %v586, 0
      %590 = vmatpush.msra.mxu0 0.0
      %591 = vmatpush.msra.mxu0 0.0
      %592 = vmatpush.msra.mxu0 0.0
      %593 = vmatpush.msra.mxu0 0.0
      %594 = vmatpush.msra.mxu0 0.0
      %595 = vmatpush.msra.mxu0 0.0
      %596 = vmatpush.msra.mxu0 0.0
      %597 = vmatpush.msra.mxu0 0.0
      %598 = vmatpush.msra.mxu0 %v583
      %599 = vmatpush.msra.mxu0 %v580
      %600 = vmatpush.msra.mxu0 %v577
      %601 = vmatpush.msra.mxu0 %v574
      %602 = vmatpush.msra.mxu0 %v571
      %603 = vmatpush.msra.mxu0 %v568
      %604 = vmatpush.msra.mxu0 %v565
      %605 = vmatpush.msra.mxu0 %v562
      %606 = vmatmul.f32.gmra.mxu0 %v464
      %v607 = vpop.f32.mrf.mxu0
      %v608 = vadd.f32 %v588, %v607
      %609 = vmatmul.f32.gmra.mxu0 %v467
      %v610 = vpop.f32.mrf.mxu0
      %v611 = vadd.f32 %v588, %v610
      %612 = vmatmul.f32.gmra.mxu0 %v470
      %v613 = vpop.f32.mrf.mxu0
      %v614 = vadd.f32 %v588, %v613
      %615 = vmatmul.f32.gmra.mxu0 %v473
      %v616 = vpop.f32.mrf.mxu0
      %v617 = vadd.f32 %v588, %v616
      %618 = vmatmul.f32.gmra.mxu0 %v476
      %v619 = vpop.f32.mrf.mxu0
      %v620 = vadd.f32 %v588, %v619
      %621 = vmatmul.f32.gmra.mxu0 %v479
      %v622 = vpop.f32.mrf.mxu0
      %v623 = vadd.f32 %v588, %v622
      %624 = vmatmul.f32.gmra.mxu0 %v482
      %v625 = vpop.f32.mrf.mxu0
      %v626 = vadd.f32 %v588, %v625
      %627 = vmatmul.f32.gmra.mxu0 %v485
      %v628 = vpop.f32.mrf.mxu0
      %v629 = vadd.f32 %v588, %v628
      %630 = vdwg.mxu0
      %vm631 = vcmp.ge.f32.partialorder %v608, 0.0
      %vm632 = vcmp.ge.f32.partialorder %v611, 0.0
      %vm633 = vcmp.ge.f32.partialorder %v614, 0.0
      %vm634 = vcmp.ge.f32.partialorder %v617, 0.0
      %vm635 = vcmp.ge.f32.partialorder %v620, 0.0
      %vm636 = vcmp.ge.f32.partialorder %v623, 0.0
      %vm637 = vcmp.ge.f32.partialorder %v626, 0.0
      %vm638 = vcmp.ge.f32.partialorder %v629, 0.0
      %v639 = vmul.f32 %v608, 0.01
      %v640 = vmul.f32 %v611, 0.01
      %v641 = vmul.f32 %v614, 0.01
      %v642 = vmul.f32 %v617, 0.01
      %v643 = vmul.f32 %v620, 0.01
      %v644 = vmul.f32 %v623, 0.01
      %v645 = vmul.f32 %v626, 0.01
      %v646 = vmul.f32 %v629, 0.01
      %v647 = vsel %vm631, %v608, %v639
      %v648 = vsel %vm632, %v611, %v640
      %v649 = vsel %vm633, %v614, %v641
      %v650 = vsel %vm634, %v617, %v642
      %v651 = vsel %vm635, %v620, %v643
      %v652 = vsel %vm636, %v623, %v644
      %v653 = vsel %vm637, %v626, %v645
      %v654 = vsel %vm638, %v629, %v646
      %s655 = scalar_lea.vmem %s5, 128
      %v656 = vld [vmem:[%s655] sm:$0xff]
      %v657 = vld [vmem:[%s655 + $0x8] sm:$0xff]
      %v658 = vld [vmem:[%s655 + $0x10] sm:$0xff]
      %v659 = vld [vmem:[%s655 + $0x18] sm:$0xff]
      %v660 = vld [vmem:[%s655 + $0x20] sm:$0xff]
      %v661 = vld [vmem:[%s655 + $0x28] sm:$0xff]
      %v662 = vld [vmem:[%s655 + $0x30] sm:$0xff]
      %v663 = vld [vmem:[%s655 + $0x38] sm:$0xff]
      %v664 = vld [vmem:[%s655 + $0x40] sm:$0xff]
      %v665 = vld [vmem:[%s655 + $0x48] sm:$0xff]
      %v666 = vld [vmem:[%s655 + $0x50] sm:$0xff]
      %v667 = vld [vmem:[%s655 + $0x58] sm:$0xff]
      %v668 = vld [vmem:[%s655 + $0x60] sm:$0xff]
      %v669 = vld [vmem:[%s655 + $0x68] sm:$0xff]
      %v670 = vld [vmem:[%s655 + $0x70] sm:$0xff]
      %v671 = vld [vmem:[%s655 + $0x78] sm:$0xff]
      %672 = vmatpush.msra.mxu0 %v671
      %673 = vmatpush.msra.mxu0 %v670
      %674 = vmatpush.msra.mxu0 %v669
      %675 = vmatpush.msra.mxu0 %v668
      %676 = vmatpush.msra.mxu0 %v667
      %677 = vmatpush.msra.mxu0 %v666
      %678 = vmatpush.msra.mxu0 %v665
      %679 = vmatpush.msra.mxu0 %v664
      %680 = vmatpush.msra.mxu0 %v663
      %681 = vmatpush.msra.mxu0 %v662
      %682 = vmatpush.msra.mxu0 %v661
      %683 = vmatpush.msra.mxu0 %v660
      %684 = vmatpush.msra.mxu0 %v659
      %685 = vmatpush.msra.mxu0 %v658
      %686 = vmatpush.msra.mxu0 %v657
      %687 = vmatpush.msra.mxu0 %v656
      %688 = vmatmul.f32.gmra.mxu0 %v647
      %v689 = vpop.f32.mrf.mxu0
      %v690 = vadd.f32 0.0, %v689
      %691 = vmatmul.f32.gmra.mxu0 %v648
      %v692 = vpop.f32.mrf.mxu0
      %v693 = vadd.f32 0.0, %v692
      %694 = vmatmul.f32.gmra.mxu0 %v649
      %v695 = vpop.f32.mrf.mxu0
      %v696 = vadd.f32 0.0, %v695
      %697 = vmatmul.f32.gmra.mxu0 %v650
      %v698 = vpop.f32.mrf.mxu0
      %v699 = vadd.f32 0.0, %v698
      %700 = vmatmul.f32.gmra.mxu0 %v651
      %v701 = vpop.f32.mrf.mxu0
      %v702 = vadd.f32 0.0, %v701
      %703 = vmatmul.f32.gmra.mxu0 %v652
      %v704 = vpop.f32.mrf.mxu0
      %v705 = vadd.f32 0.0, %v704
      %706 = vmatmul.f32.gmra.mxu0 %v653
      %v707 = vpop.f32.mrf.mxu0
      %v708 = vadd.f32 0.0, %v707
      %709 = vmatmul.f32.gmra.mxu0 %v654
      %v710 = vpop.f32.mrf.mxu0
      %v711 = vadd.f32 0.0, %v710
      %712 = vdwg.mxu0
      %s713 = scalar_lea.vmem %s6, 2
      %v714 = vld [vmem:[%s713] sm:$0x1]
      %v716 = vperm.slane %v714, 0
      %718 = vmatpush.msra.mxu0 0.0
      %719 = vmatpush.msra.mxu0 0.0
      %720 = vmatpush.msra.mxu0 0.0
      %721 = vmatpush.msra.mxu0 0.0
      %722 = vmatpush.msra.mxu0 0.0
      %723 = vmatpush.msra.mxu0 0.0
      %724 = vmatpush.msra.mxu0 0.0
      %725 = vmatpush.msra.mxu0 0.0
      %726 = vmatpush.msra.mxu0 %v711
      %727 = vmatpush.msra.mxu0 %v708
      %728 = vmatpush.msra.mxu0 %v705
      %729 = vmatpush.msra.mxu0 %v702
      %730 = vmatpush.msra.mxu0 %v699
      %731 = vmatpush.msra.mxu0 %v696
      %732 = vmatpush.msra.mxu0 %v693
      %733 = vmatpush.msra.mxu0 %v690
      %734 = vmatmul.f32.gmra.mxu0 %v464
      %v735 = vpop.f32.mrf.mxu0
      %v736 = vadd.f32 %v716, %v735
      %737 = vmatmul.f32.gmra.mxu0 %v467
      %v738 = vpop.f32.mrf.mxu0
      %v739 = vadd.f32 %v716, %v738
      %740 = vmatmul.f32.gmra.mxu0 %v470
      %v741 = vpop.f32.mrf.mxu0
      %v742 = vadd.f32 %v716, %v741
      %743 = vmatmul.f32.gmra.mxu0 %v473
      %v744 = vpop.f32.mrf.mxu0
      %v745 = vadd.f32 %v716, %v744
      %746 = vmatmul.f32.gmra.mxu0 %v476
      %v747 = vpop.f32.mrf.mxu0
      %v748 = vadd.f32 %v716, %v747
      %749 = vmatmul.f32.gmra.mxu0 %v479
      %v750 = vpop.f32.mrf.mxu0
      %v751 = vadd.f32 %v716, %v750
      %752 = vmatmul.f32.gmra.mxu0 %v482
      %v753 = vpop.f32.mrf.mxu0
      %v754 = vadd.f32 %v716, %v753
      %755 = vmatmul.f32.gmra.mxu0 %v485
      %v756 = vpop.f32.mrf.mxu0
      %v757 = vadd.f32 %v716, %v756
      %758 = vdwg.mxu0
      %s759 = scalar_lea.vmem %s5, 256
      %v760 = vld [vmem:[%s759] sm:$0xff]
      %v761 = vld [vmem:[%s759 + $0x8] sm:$0xff]
      %v762 = vld [vmem:[%s759 + $0x10] sm:$0xff]
      %v763 = vld [vmem:[%s759 + $0x18] sm:$0xff]
      %v764 = vld [vmem:[%s759 + $0x20] sm:$0xff]
      %v765 = vld [vmem:[%s759 + $0x28] sm:$0xff]
      %v766 = vld [vmem:[%s759 + $0x30] sm:$0xff]
      %v767 = vld [vmem:[%s759 + $0x38] sm:$0xff]
      %v768 = vld [vmem:[%s759 + $0x40] sm:$0xff]
      %v769 = vld [vmem:[%s759 + $0x48] sm:$0xff]
      %v770 = vld [vmem:[%s759 + $0x50] sm:$0xff]
      %v771 = vld [vmem:[%s759 + $0x58] sm:$0xff]
      %v772 = vld [vmem:[%s759 + $0x60] sm:$0xff]
      %v773 = vld [vmem:[%s759 + $0x68] sm:$0xff]
      %v774 = vld [vmem:[%s759 + $0x70] sm:$0xff]
      %v775 = vld [vmem:[%s759 + $0x78] sm:$0xff]
      %776 = vmatpush.msra.mxu0 %v775
      %777 = vmatpush.msra.mxu0 %v774
      %778 = vmatpush.msra.mxu0 %v773
      %779 = vmatpush.msra.mxu0 %v772
      %780 = vmatpush.msra.mxu0 %v771
      %781 = vmatpush.msra.mxu0 %v770
      %782 = vmatpush.msra.mxu0 %v769
      %783 = vmatpush.msra.mxu0 %v768
      %784 = vmatpush.msra.mxu0 %v767
      %785 = vmatpush.msra.mxu0 %v766
      %786 = vmatpush.msra.mxu0 %v765
      %787 = vmatpush.msra.mxu0 %v764
      %788 = vmatpush.msra.mxu0 %v763
      %789 = vmatpush.msra.mxu0 %v762
      %790 = vmatpush.msra.mxu0 %v761
      %791 = vmatpush.msra.mxu0 %v760
      %792 = vmatmul.f32.gmra.mxu0 %v736
      %v793 = vpop.f32.mrf.mxu0
      %v794 = vadd.f32 0.0, %v793
      %795 = vmatmul.f32.gmra.mxu0 %v739
      %v796 = vpop.f32.mrf.mxu0
      %v797 = vadd.f32 0.0, %v796
      %798 = vmatmul.f32.gmra.mxu0 %v742
      %v799 = vpop.f32.mrf.mxu0
      %v800 = vadd.f32 0.0, %v799
      %801 = vmatmul.f32.gmra.mxu0 %v745
      %v802 = vpop.f32.mrf.mxu0
      %v803 = vadd.f32 0.0, %v802
      %804 = vmatmul.f32.gmra.mxu0 %v748
      %v805 = vpop.f32.mrf.mxu0
      %v806 = vadd.f32 0.0, %v805
      %807 = vmatmul.f32.gmra.mxu0 %v751
      %v808 = vpop.f32.mrf.mxu0
      %v809 = vadd.f32 0.0, %v808
      %810 = vmatmul.f32.gmra.mxu0 %v754
      %v811 = vpop.f32.mrf.mxu0
      %v812 = vadd.f32 0.0, %v811
      %813 = vmatmul.f32.gmra.mxu0 %v757
      %v814 = vpop.f32.mrf.mxu0
      %v815 = vadd.f32 0.0, %v814
      %816 = vdwg.mxu0
      %s817 = scalar_lea.vmem %s6, 3
      %v818 = vld [vmem:[%s817] sm:$0x1]
      %v820 = vperm.slane %v818, 0
      %822 = vmatpush.msra.mxu0 0.0
      %823 = vmatpush.msra.mxu0 0.0
      %824 = vmatpush.msra.mxu0 0.0
      %825 = vmatpush.msra.mxu0 0.0
      %826 = vmatpush.msra.mxu0 0.0
      %827 = vmatpush.msra.mxu0 0.0
      %828 = vmatpush.msra.mxu0 0.0
      %829 = vmatpush.msra.mxu0 0.0
      %830 = vmatpush.msra.mxu0 %v815
      %831 = vmatpush.msra.mxu0 %v812
      %832 = vmatpush.msra.mxu0 %v809
      %833 = vmatpush.msra.mxu0 %v806
      %834 = vmatpush.msra.mxu0 %v803
      %835 = vmatpush.msra.mxu0 %v800
      %836 = vmatpush.msra.mxu0 %v797
      %837 = vmatpush.msra.mxu0 %v794
      %838 = vmatmul.f32.gmra.mxu0 %v464
      %v839 = vpop.f32.mrf.mxu0
      %v840 = vadd.f32 %v820, %v839
      %841 = vmatmul.f32.gmra.mxu0 %v467
      %v842 = vpop.f32.mrf.mxu0
      %v843 = vadd.f32 %v820, %v842
      %844 = vmatmul.f32.gmra.mxu0 %v470
      %v845 = vpop.f32.mrf.mxu0
      %v846 = vadd.f32 %v820, %v845
      %847 = vmatmul.f32.gmra.mxu0 %v473
      %v848 = vpop.f32.mrf.mxu0
      %v849 = vadd.f32 %v820, %v848
      %850 = vmatmul.f32.gmra.mxu0 %v476
      %v851 = vpop.f32.mrf.mxu0
      %v852 = vadd.f32 %v820, %v851
      %853 = vmatmul.f32.gmra.mxu0 %v479
      %v854 = vpop.f32.mrf.mxu0
      %v855 = vadd.f32 %v820, %v854
      %856 = vmatmul.f32.gmra.mxu0 %v482
      %v857 = vpop.f32.mrf.mxu0
      %v858 = vadd.f32 %v820, %v857
      %859 = vmatmul.f32.gmra.mxu0 %v485
      %v860 = vpop.f32.mrf.mxu0
      %v861 = vadd.f32 %v820, %v860
      %862 = vdwg.mxu0
      %vm863 = vcmp.ge.f32.partialorder %v840, 0.0
      %vm864 = vcmp.ge.f32.partialorder %v843, 0.0
      %vm865 = vcmp.ge.f32.partialorder %v846, 0.0
      %vm866 = vcmp.ge.f32.partialorder %v849, 0.0
      %vm867 = vcmp.ge.f32.partialorder %v852, 0.0
      %vm868 = vcmp.ge.f32.partialorder %v855, 0.0
      %vm869 = vcmp.ge.f32.partialorder %v858, 0.0
      %vm870 = vcmp.ge.f32.partialorder %v861, 0.0
      %v871 = vmul.f32 %v840, 0.01
      %v872 = vmul.f32 %v843, 0.01
      %v873 = vmul.f32 %v846, 0.01
      %v874 = vmul.f32 %v849, 0.01
      %v875 = vmul.f32 %v852, 0.01
      %v876 = vmul.f32 %v855, 0.01
      %v877 = vmul.f32 %v858, 0.01
      %v878 = vmul.f32 %v861, 0.01
      %v879 = vsel %vm863, %v840, %v871
      %v880 = vsel %vm864, %v843, %v872
      %v881 = vsel %vm865, %v846, %v873
      %v882 = vsel %vm866, %v849, %v874
      %v883 = vsel %vm867, %v852, %v875
      %v884 = vsel %vm868, %v855, %v876
      %v885 = vsel %vm869, %v858, %v877
      %v886 = vsel %vm870, %v861, %v878
      %s887 = scalar_lea.vmem %s5, 384
      %v888 = vld [vmem:[%s887] sm:$0xff]
      %v889 = vld [vmem:[%s887 + $0x8] sm:$0xff]
      %v890 = vld [vmem:[%s887 + $0x10] sm:$0xff]
      %v891 = vld [vmem:[%s887 + $0x18] sm:$0xff]
      %v892 = vld [vmem:[%s887 + $0x20] sm:$0xff]
      %v893 = vld [vmem:[%s887 + $0x28] sm:$0xff]
      %v894 = vld [vmem:[%s887 + $0x30] sm:$0xff]
      %v895 = vld [vmem:[%s887 + $0x38] sm:$0xff]
      %v896 = vld [vmem:[%s887 + $0x40] sm:$0xff]
      %v897 = vld [vmem:[%s887 + $0x48] sm:$0xff]
      %v898 = vld [vmem:[%s887 + $0x50] sm:$0xff]
      %v899 = vld [vmem:[%s887 + $0x58] sm:$0xff]
      %v900 = vld [vmem:[%s887 + $0x60] sm:$0xff]
      %v901 = vld [vmem:[%s887 + $0x68] sm:$0xff]
      %v902 = vld [vmem:[%s887 + $0x70] sm:$0xff]
      %v903 = vld [vmem:[%s887 + $0x78] sm:$0xff]
      %904 = vmatpush.msra.mxu0 %v903
      %905 = vmatpush.msra.mxu0 %v902
      %906 = vmatpush.msra.mxu0 %v901
      %907 = vmatpush.msra.mxu0 %v900
      %908 = vmatpush.msra.mxu0 %v899
      %909 = vmatpush.msra.mxu0 %v898
      %910 = vmatpush.msra.mxu0 %v897
      %911 = vmatpush.msra.mxu0 %v896
      %912 = vmatpush.msra.mxu0 %v895
      %913 = vmatpush.msra.mxu0 %v894
      %914 = vmatpush.msra.mxu0 %v893
      %915 = vmatpush.msra.mxu0 %v892
      %916 = vmatpush.msra.mxu0 %v891
      %917 = vmatpush.msra.mxu0 %v890
      %918 = vmatpush.msra.mxu0 %v889
      %919 = vmatpush.msra.mxu0 %v888
      %920 = vmatmul.f32.gmra.mxu0 %v879
      %v921 = vpop.f32.mrf.mxu0
      %v922 = vadd.f32 0.0, %v921
      %923 = vmatmul.f32.gmra.mxu0 %v880
      %v924 = vpop.f32.mrf.mxu0
      %v925 = vadd.f32 0.0, %v924
      %926 = vmatmul.f32.gmra.mxu0 %v881
      %v927 = vpop.f32.mrf.mxu0
      %v928 = vadd.f32 0.0, %v927
      %929 = vmatmul.f32.gmra.mxu0 %v882
      %v930 = vpop.f32.mrf.mxu0
      %v931 = vadd.f32 0.0, %v930
      %932 = vmatmul.f32.gmra.mxu0 %v883
      %v933 = vpop.f32.mrf.mxu0
      %v934 = vadd.f32 0.0, %v933
      %935 = vmatmul.f32.gmra.mxu0 %v884
      %v936 = vpop.f32.mrf.mxu0
      %v937 = vadd.f32 0.0, %v936
      %938 = vmatmul.f32.gmra.mxu0 %v885
      %v939 = vpop.f32.mrf.mxu0
      %v940 = vadd.f32 0.0, %v939
      %941 = vmatmul.f32.gmra.mxu0 %v886
      %v942 = vpop.f32.mrf.mxu0
      %v943 = vadd.f32 0.0, %v942
      %944 = vdwg.mxu0
      %s945 = scalar_lea.vmem %s6, 4
      %v946 = vld [vmem:[%s945] sm:$0x1]
      %v948 = vperm.slane %v946, 0
      %950 = vmatpush.msra.mxu0 0.0
      %951 = vmatpush.msra.mxu0 0.0
      %952 = vmatpush.msra.mxu0 0.0
      %953 = vmatpush.msra.mxu0 0.0
      %954 = vmatpush.msra.mxu0 0.0
      %955 = vmatpush.msra.mxu0 0.0
      %956 = vmatpush.msra.mxu0 0.0
      %957 = vmatpush.msra.mxu0 0.0
      %958 = vmatpush.msra.mxu0 %v943
      %959 = vmatpush.msra.mxu0 %v940
      %960 = vmatpush.msra.mxu0 %v937
      %961 = vmatpush.msra.mxu0 %v934
      %962 = vmatpush.msra.mxu0 %v931
      %963 = vmatpush.msra.mxu0 %v928
      %964 = vmatpush.msra.mxu0 %v925
      %965 = vmatpush.msra.mxu0 %v922
      %966 = vmatmul.f32.gmra.mxu0 %v464
      %v967 = vpop.f32.mrf.mxu0
      %v968 = vadd.f32 %v948, %v967
      %969 = vmatmul.f32.gmra.mxu0 %v467
      %v970 = vpop.f32.mrf.mxu0
      %v971 = vadd.f32 %v948, %v970
      %972 = vmatmul.f32.gmra.mxu0 %v470
      %v973 = vpop.f32.mrf.mxu0
      %v974 = vadd.f32 %v948, %v973
      %975 = vmatmul.f32.gmra.mxu0 %v473
      %v976 = vpop.f32.mrf.mxu0
      %v977 = vadd.f32 %v948, %v976
      %978 = vmatmul.f32.gmra.mxu0 %v476
      %v979 = vpop.f32.mrf.mxu0
      %v980 = vadd.f32 %v948, %v979
      %981 = vmatmul.f32.gmra.mxu0 %v479
      %v982 = vpop.f32.mrf.mxu0
      %v983 = vadd.f32 %v948, %v982
      %984 = vmatmul.f32.gmra.mxu0 %v482
      %v985 = vpop.f32.mrf.mxu0
      %v986 = vadd.f32 %v948, %v985
      %987 = vmatmul.f32.gmra.mxu0 %v485
      %v988 = vpop.f32.mrf.mxu0
      %v989 = vadd.f32 %v948, %v988
      %990 = vdwg.mxu0
      %s991 = scalar_lea.vmem %s5, 512
      %v992 = vld [vmem:[%s991] sm:$0xff]
      %v993 = vld [vmem:[%s991 + $0x8] sm:$0xff]
      %v994 = vld [vmem:[%s991 + $0x10] sm:$0xff]
      %v995 = vld [vmem:[%s991 + $0x18] sm:$0xff]
      %v996 = vld [vmem:[%s991 + $0x20] sm:$0xff]
      %v997 = vld [vmem:[%s991 + $0x28] sm:$0xff]
      %v998 = vld [vmem:[%s991 + $0x30] sm:$0xff]
      %v999 = vld [vmem:[%s991 + $0x38] sm:$0xff]
      %v1000 = vld [vmem:[%s991 + $0x40] sm:$0xff]
      %v1001 = vld [vmem:[%s991 + $0x48] sm:$0xff]
      %v1002 = vld [vmem:[%s991 + $0x50] sm:$0xff]
      %v1003 = vld [vmem:[%s991 + $0x58] sm:$0xff]
      %v1004 = vld [vmem:[%s991 + $0x60] sm:$0xff]
      %v1005 = vld [vmem:[%s991 + $0x68] sm:$0xff]
      %v1006 = vld [vmem:[%s991 + $0x70] sm:$0xff]
      %v1007 = vld [vmem:[%s991 + $0x78] sm:$0xff]
      %1008 = vmatpush.msra.mxu0 %v1007
      %1009 = vmatpush.msra.mxu0 %v1006
      %1010 = vmatpush.msra.mxu0 %v1005
      %1011 = vmatpush.msra.mxu0 %v1004
      %1012 = vmatpush.msra.mxu0 %v1003
      %1013 = vmatpush.msra.mxu0 %v1002
      %1014 = vmatpush.msra.mxu0 %v1001
      %1015 = vmatpush.msra.mxu0 %v1000
      %1016 = vmatpush.msra.mxu0 %v999
      %1017 = vmatpush.msra.mxu0 %v998
      %1018 = vmatpush.msra.mxu0 %v997
      %1019 = vmatpush.msra.mxu0 %v996
      %1020 = vmatpush.msra.mxu0 %v995
      %1021 = vmatpush.msra.mxu0 %v994
      %1022 = vmatpush.msra.mxu0 %v993
      %1023 = vmatpush.msra.mxu0 %v992
      %1024 = vmatmul.f32.gmra.mxu0 %v968
      %v1025 = vpop.f32.mrf.mxu0
      %v1026 = vadd.f32 0.0, %v1025
      %1027 = vmatmul.f32.gmra.mxu0 %v971
      %v1028 = vpop.f32.mrf.mxu0
      %v1029 = vadd.f32 0.0, %v1028
      %1030 = vmatmul.f32.gmra.mxu0 %v974
      %v1031 = vpop.f32.mrf.mxu0
      %v1032 = vadd.f32 0.0, %v1031
      %1033 = vmatmul.f32.gmra.mxu0 %v977
      %v1034 = vpop.f32.mrf.mxu0
      %v1035 = vadd.f32 0.0, %v1034
      %1036 = vmatmul.f32.gmra.mxu0 %v980
      %v1037 = vpop.f32.mrf.mxu0
      %v1038 = vadd.f32 0.0, %v1037
      %1039 = vmatmul.f32.gmra.mxu0 %v983
      %v1040 = vpop.f32.mrf.mxu0
      %v1041 = vadd.f32 0.0, %v1040
      %1042 = vmatmul.f32.gmra.mxu0 %v986
      %v1043 = vpop.f32.mrf.mxu0
      %v1044 = vadd.f32 0.0, %v1043
      %1045 = vmatmul.f32.gmra.mxu0 %v989
      %v1046 = vpop.f32.mrf.mxu0
      %v1047 = vadd.f32 0.0, %v1046
      %1048 = vdwg.mxu0
      %s1049 = scalar_lea.vmem %s6, 5
      %v1050 = vld [vmem:[%s1049] sm:$0x1]
      %v1052 = vperm.slane %v1050, 0
      %1054 = vmatpush.msra.mxu0 0.0
      %1055 = vmatpush.msra.mxu0 0.0
      %1056 = vmatpush.msra.mxu0 0.0
      %1057 = vmatpush.msra.mxu0 0.0
      %1058 = vmatpush.msra.mxu0 0.0
      %1059 = vmatpush.msra.mxu0 0.0
      %1060 = vmatpush.msra.mxu0 0.0
      %1061 = vmatpush.msra.mxu0 0.0
      %1062 = vmatpush.msra.mxu0 %v1047
      %1063 = vmatpush.msra.mxu0 %v1044
      %1064 = vmatpush.msra.mxu0 %v1041
      %1065 = vmatpush.msra.mxu0 %v1038
      %1066 = vmatpush.msra.mxu0 %v1035
      %1067 = vmatpush.msra.mxu0 %v1032
      %1068 = vmatpush.msra.mxu0 %v1029
      %1069 = vmatpush.msra.mxu0 %v1026
      %1070 = vmatmul.f32.gmra.mxu0 %v464
      %v1071 = vpop.f32.mrf.mxu0
      %v1072 = vadd.f32 %v1052, %v1071
      %1073 = vmatmul.f32.gmra.mxu0 %v467
      %v1074 = vpop.f32.mrf.mxu0
      %v1075 = vadd.f32 %v1052, %v1074
      %1076 = vmatmul.f32.gmra.mxu0 %v470
      %v1077 = vpop.f32.mrf.mxu0
      %v1078 = vadd.f32 %v1052, %v1077
      %1079 = vmatmul.f32.gmra.mxu0 %v473
      %v1080 = vpop.f32.mrf.mxu0
      %v1081 = vadd.f32 %v1052, %v1080
      %1082 = vmatmul.f32.gmra.mxu0 %v476
      %v1083 = vpop.f32.mrf.mxu0
      %v1084 = vadd.f32 %v1052, %v1083
      %1085 = vmatmul.f32.gmra.mxu0 %v479
      %v1086 = vpop.f32.mrf.mxu0
      %v1087 = vadd.f32 %v1052, %v1086
      %1088 = vmatmul.f32.gmra.mxu0 %v482
      %v1089 = vpop.f32.mrf.mxu0
      %v1090 = vadd.f32 %v1052, %v1089
      %1091 = vmatmul.f32.gmra.mxu0 %v485
      %v1092 = vpop.f32.mrf.mxu0
      %v1093 = vadd.f32 %v1052, %v1092
      %1094 = vdwg.mxu0
      %vm1095 = vcmp.ge.f32.partialorder %v1072, 0.0
      %vm1096 = vcmp.ge.f32.partialorder %v1075, 0.0
      %vm1097 = vcmp.ge.f32.partialorder %v1078, 0.0
      %vm1098 = vcmp.ge.f32.partialorder %v1081, 0.0
      %vm1099 = vcmp.ge.f32.partialorder %v1084, 0.0
      %vm1100 = vcmp.ge.f32.partialorder %v1087, 0.0
      %vm1101 = vcmp.ge.f32.partialorder %v1090, 0.0
      %vm1102 = vcmp.ge.f32.partialorder %v1093, 0.0
      %v1103 = vmul.f32 %v1072, 0.01
      %v1104 = vmul.f32 %v1075, 0.01
      %v1105 = vmul.f32 %v1078, 0.01
      %v1106 = vmul.f32 %v1081, 0.01
      %v1107 = vmul.f32 %v1084, 0.01
      %v1108 = vmul.f32 %v1087, 0.01
      %v1109 = vmul.f32 %v1090, 0.01
      %v1110 = vmul.f32 %v1093, 0.01
      %v1111 = vsel %vm1095, %v1072, %v1103
      %v1112 = vsel %vm1096, %v1075, %v1104
      %v1113 = vsel %vm1097, %v1078, %v1105
      %v1114 = vsel %vm1098, %v1081, %v1106
      %v1115 = vsel %vm1099, %v1084, %v1107
      %v1116 = vsel %vm1100, %v1087, %v1108
      %v1117 = vsel %vm1101, %v1090, %v1109
      %v1118 = vsel %vm1102, %v1093, %v1110
      %v1119 = vld [vmem:[%s8] sm:$0xff]
      %v1120 = vld [vmem:[%s8 + $0x8] sm:$0xff]
      %v1121 = vld [vmem:[%s8 + $0x10] sm:$0xff]
      %v1122 = vld [vmem:[%s8 + $0x18] sm:$0xff]
      %v1123 = vld [vmem:[%s8 + $0x20] sm:$0xff]
      %v1124 = vld [vmem:[%s8 + $0x28] sm:$0xff]
      %v1125 = vld [vmem:[%s8 + $0x30] sm:$0xff]
      %v1126 = vld [vmem:[%s8 + $0x38] sm:$0xff]
      %v1127 = vld [vmem:[%s8 + $0x40] sm:$0xff]
      %v1128 = vld [vmem:[%s8 + $0x48] sm:$0xff]
      %v1129 = vld [vmem:[%s8 + $0x50] sm:$0xff]
      %v1130 = vld [vmem:[%s8 + $0x58] sm:$0xff]
      %v1131 = vld [vmem:[%s8 + $0x60] sm:$0xff]
      %v1132 = vld [vmem:[%s8 + $0x68] sm:$0xff]
      %v1133 = vld [vmem:[%s8 + $0x70] sm:$0xff]
      %v1134 = vld [vmem:[%s8 + $0x78] sm:$0xff]
      %v1135 = vld [vmem:[%s8 + $0x80] sm:$0xff]
      %v1136 = vld [vmem:[%s8 + $0x88] sm:$0xff]
      %v1137 = vld [vmem:[%s8 + $0x90] sm:$0xff]
      %v1138 = vld [vmem:[%s8 + $0x98] sm:$0xff]
      %v1139 = vld [vmem:[%s8 + $0xa0] sm:$0xff]
      %v1140 = vld [vmem:[%s8 + $0xa8] sm:$0xff]
      %v1141 = vld [vmem:[%s8 + $0xb0] sm:$0xff]
      %v1142 = vld [vmem:[%s8 + $0xb8] sm:$0xff]
      %v1143 = vld [vmem:[%s8 + $0xc0] sm:$0xff]
      %v1144 = vld [vmem:[%s8 + $0xc8] sm:$0xff]
      %v1145 = vld [vmem:[%s8 + $0xd0] sm:$0xff]
      %v1146 = vld [vmem:[%s8 + $0xd8] sm:$0xff]
      %v1147 = vld [vmem:[%s8 + $0xe0] sm:$0xff]
      %v1148 = vld [vmem:[%s8 + $0xe8] sm:$0xff]
      %v1149 = vld [vmem:[%s8 + $0xf0] sm:$0xff]
      %v1150 = vld [vmem:[%s8 + $0xf8] sm:$0xff]
      %v1151 = vld [vmem:[%s7] sm:$0xff]
      %v1152 = vld [vmem:[%s7 + $0x8] sm:$0xff]
      %v1153 = vld [vmem:[%s7 + $0x10] sm:$0xff]
      %v1154 = vld [vmem:[%s7 + $0x18] sm:$0xff]
      %v1155 = vld [vmem:[%s7 + $0x20] sm:$0xff]
      %v1156 = vld [vmem:[%s7 + $0x28] sm:$0xff]
      %v1157 = vld [vmem:[%s7 + $0x30] sm:$0xff]
      %v1158 = vld [vmem:[%s7 + $0x38] sm:$0xff]
      %v1159 = vld [vmem:[%s7 + $0x40] sm:$0xff]
      %v1160 = vld [vmem:[%s7 + $0x48] sm:$0xff]
      %v1161 = vld [vmem:[%s7 + $0x50] sm:$0xff]
      %v1162 = vld [vmem:[%s7 + $0x58] sm:$0xff]
      %v1163 = vld [vmem:[%s7 + $0x60] sm:$0xff]
      %v1164 = vld [vmem:[%s7 + $0x68] sm:$0xff]
      %v1165 = vld [vmem:[%s7 + $0x70] sm:$0xff]
      %v1166 = vld [vmem:[%s7 + $0x78] sm:$0xff]
      %v1167 = vld [vmem:[%s7 + $0x80] sm:$0xff]
      %v1168 = vld [vmem:[%s7 + $0x88] sm:$0xff]
      %v1169 = vld [vmem:[%s7 + $0x90] sm:$0xff]
      %v1170 = vld [vmem:[%s7 + $0x98] sm:$0xff]
      %v1171 = vld [vmem:[%s7 + $0xa0] sm:$0xff]
      %v1172 = vld [vmem:[%s7 + $0xa8] sm:$0xff]
      %v1173 = vld [vmem:[%s7 + $0xb0] sm:$0xff]
      %v1174 = vld [vmem:[%s7 + $0xb8] sm:$0xff]
      %v1175 = vld [vmem:[%s7 + $0xc0] sm:$0xff]
      %v1176 = vld [vmem:[%s7 + $0xc8] sm:$0xff]
      %v1177 = vld [vmem:[%s7 + $0xd0] sm:$0xff]
      %v1178 = vld [vmem:[%s7 + $0xd8] sm:$0xff]
      %v1179 = vld [vmem:[%s7 + $0xe0] sm:$0xff]
      %v1180 = vld [vmem:[%s7 + $0xe8] sm:$0xff]
      %v1181 = vld [vmem:[%s7 + $0xf0] sm:$0xff]
      %v1182 = vld [vmem:[%s7 + $0xf8] sm:$0xff]
      %v1184 = vsel %vm462, %v1151, 0
      %v1187 = vsel %vm462, %v1152, 0
      %v1190 = vsel %vm462, %v1153, 0
      %v1193 = vsel %vm462, %v1154, 0
      %v1196 = vsel %vm462, %v1155, 0
      %v1199 = vsel %vm462, %v1156, 0
      %v1202 = vsel %vm462, %v1157, 0
      %v1205 = vsel %vm462, %v1158, 0
      %v1208 = vsel %vm462, %v1159, 0
      %v1211 = vsel %vm462, %v1160, 0
      %v1214 = vsel %vm462, %v1161, 0
      %v1217 = vsel %vm462, %v1162, 0
      %v1220 = vsel %vm462, %v1163, 0
      %v1223 = vsel %vm462, %v1164, 0
      %v1226 = vsel %vm462, %v1165, 0
      %v1229 = vsel %vm462, %v1166, 0
      %v1232 = vsel %vm462, %v1167, 0
      %v1235 = vsel %vm462, %v1168, 0
      %v1238 = vsel %vm462, %v1169, 0
      %v1241 = vsel %vm462, %v1170, 0
      %v1244 = vsel %vm462, %v1171, 0
      %v1247 = vsel %vm462, %v1172, 0
      %v1250 = vsel %vm462, %v1173, 0
      %v1253 = vsel %vm462, %v1174, 0
      %v1256 = vsel %vm462, %v1175, 0
      %v1259 = vsel %vm462, %v1176, 0
      %v1262 = vsel %vm462, %v1177, 0
      %v1265 = vsel %vm462, %v1178, 0
      %v1268 = vsel %vm462, %v1179, 0
      %v1271 = vsel %vm462, %v1180, 0
      %v1274 = vsel %vm462, %v1181, 0
      %v1277 = vsel %vm462, %v1182, 0
      %1279 = vmatpush.msra.mxu0 0.0
      %1280 = vmatpush.msra.mxu0 0.0
      %1281 = vmatpush.msra.mxu0 0.0
      %1282 = vmatpush.msra.mxu0 0.0
      %1283 = vmatpush.msra.mxu0 0.0
      %1284 = vmatpush.msra.mxu0 0.0
      %1285 = vmatpush.msra.mxu0 0.0
      %1286 = vmatpush.msra.mxu0 0.0
      %1287 = vmatpush.msra.mxu0 %v1118
      %1288 = vmatpush.msra.mxu0 %v1117
      %1289 = vmatpush.msra.mxu0 %v1116
      %1290 = vmatpush.msra.mxu0 %v1115
      %1291 = vmatpush.msra.mxu0 %v1114
      %1292 = vmatpush.msra.mxu0 %v1113
      %1293 = vmatpush.msra.mxu0 %v1112
      %1294 = vmatpush.msra.mxu0 %v1111
      %1295 = vmatmul.f32.gmra.mxu0 %v1184
      %v1296 = vpop.f32.mrf.mxu0
      %v1297 = vadd.f32 0.0, %v1296
      %1298 = vmatmul.f32.gmra.mxu0 %v1187
      %v1299 = vpop.f32.mrf.mxu0
      %v1300 = vadd.f32 0.0, %v1299
      %1301 = vmatmul.f32.gmra.mxu0 %v1190
      %v1302 = vpop.f32.mrf.mxu0
      %v1303 = vadd.f32 0.0, %v1302
      %1304 = vmatmul.f32.gmra.mxu0 %v1193
      %v1305 = vpop.f32.mrf.mxu0
      %v1306 = vadd.f32 0.0, %v1305
      %1307 = vmatmul.f32.gmra.mxu0 %v1196
      %v1308 = vpop.f32.mrf.mxu0
      %v1309 = vadd.f32 0.0, %v1308
      %1310 = vmatmul.f32.gmra.mxu0 %v1199
      %v1311 = vpop.f32.mrf.mxu0
      %v1312 = vadd.f32 0.0, %v1311
      %1313 = vmatmul.f32.gmra.mxu0 %v1202
      %v1314 = vpop.f32.mrf.mxu0
      %v1315 = vadd.f32 0.0, %v1314
      %1316 = vmatmul.f32.gmra.mxu0 %v1205
      %v1317 = vpop.f32.mrf.mxu0
      %v1318 = vadd.f32 0.0, %v1317
      %1319 = vmatmul.f32.gmra.mxu0 %v1208
      %v1320 = vpop.f32.mrf.mxu0
      %v1321 = vadd.f32 0.0, %v1320
      %1322 = vmatmul.f32.gmra.mxu0 %v1211
      %v1323 = vpop.f32.mrf.mxu0
      %v1324 = vadd.f32 0.0, %v1323
      %1325 = vmatmul.f32.gmra.mxu0 %v1214
      %v1326 = vpop.f32.mrf.mxu0
      %v1327 = vadd.f32 0.0, %v1326
      %1328 = vmatmul.f32.gmra.mxu0 %v1217
      %v1329 = vpop.f32.mrf.mxu0
      %v1330 = vadd.f32 0.0, %v1329
      %1331 = vmatmul.f32.gmra.mxu0 %v1220
      %v1332 = vpop.f32.mrf.mxu0
      %v1333 = vadd.f32 0.0, %v1332
      %1334 = vmatmul.f32.gmra.mxu0 %v1223
      %v1335 = vpop.f32.mrf.mxu0
      %v1336 = vadd.f32 0.0, %v1335
      %1337 = vmatmul.f32.gmra.mxu0 %v1226
      %v1338 = vpop.f32.mrf.mxu0
      %v1339 = vadd.f32 0.0, %v1338
      %1340 = vmatmul.f32.gmra.mxu0 %v1229
      %v1341 = vpop.f32.mrf.mxu0
      %v1342 = vadd.f32 0.0, %v1341
      %1343 = vmatmul.f32.gmra.mxu0 %v1232
      %v1344 = vpop.f32.mrf.mxu0
      %v1345 = vadd.f32 0.0, %v1344
      %1346 = vmatmul.f32.gmra.mxu0 %v1235
      %v1347 = vpop.f32.mrf.mxu0
      %v1348 = vadd.f32 0.0, %v1347
      %1349 = vmatmul.f32.gmra.mxu0 %v1238
      %v1350 = vpop.f32.mrf.mxu0
      %v1351 = vadd.f32 0.0, %v1350
      %1352 = vmatmul.f32.gmra.mxu0 %v1241
      %v1353 = vpop.f32.mrf.mxu0
      %v1354 = vadd.f32 0.0, %v1353
      %1355 = vmatmul.f32.gmra.mxu0 %v1244
      %v1356 = vpop.f32.mrf.mxu0
      %v1357 = vadd.f32 0.0, %v1356
      %1358 = vmatmul.f32.gmra.mxu0 %v1247
      %v1359 = vpop.f32.mrf.mxu0
      %v1360 = vadd.f32 0.0, %v1359
      %1361 = vmatmul.f32.gmra.mxu0 %v1250
      %v1362 = vpop.f32.mrf.mxu0
      %v1363 = vadd.f32 0.0, %v1362
      %1364 = vmatmul.f32.gmra.mxu0 %v1253
      %v1365 = vpop.f32.mrf.mxu0
      %v1366 = vadd.f32 0.0, %v1365
      %1367 = vmatmul.f32.gmra.mxu0 %v1256
      %v1368 = vpop.f32.mrf.mxu0
      %v1369 = vadd.f32 0.0, %v1368
      %1370 = vmatmul.f32.gmra.mxu0 %v1259
      %v1371 = vpop.f32.mrf.mxu0
      %v1372 = vadd.f32 0.0, %v1371
      %1373 = vmatmul.f32.gmra.mxu0 %v1262
      %v1374 = vpop.f32.mrf.mxu0
      %v1375 = vadd.f32 0.0, %v1374
      %1376 = vmatmul.f32.gmra.mxu0 %v1265
      %v1377 = vpop.f32.mrf.mxu0
      %v1378 = vadd.f32 0.0, %v1377
      %1379 = vmatmul.f32.gmra.mxu0 %v1268
      %v1380 = vpop.f32.mrf.mxu0
      %v1381 = vadd.f32 0.0, %v1380
      %1382 = vmatmul.f32.gmra.mxu0 %v1271
      %v1383 = vpop.f32.mrf.mxu0
      %v1384 = vadd.f32 0.0, %v1383
      %1385 = vmatmul.f32.gmra.mxu0 %v1274
      %v1386 = vpop.f32.mrf.mxu0
      %v1387 = vadd.f32 0.0, %v1386
      %1388 = vmatmul.f32.gmra.mxu0 %v1277
      %v1389 = vpop.f32.mrf.mxu0
      %v1390 = vadd.f32 0.0, %v1389
      %1391 = vdwg.mxu0
      %v1392 = vadd.f32 %v1119, %v1297
      %v1393 = vadd.f32 %v1120, %v1300
      %v1394 = vadd.f32 %v1121, %v1303
      %v1395 = vadd.f32 %v1122, %v1306
      %v1396 = vadd.f32 %v1123, %v1309
      %v1397 = vadd.f32 %v1124, %v1312
      %v1398 = vadd.f32 %v1125, %v1315
      %v1399 = vadd.f32 %v1126, %v1318
      %v1400 = vadd.f32 %v1127, %v1321
      %v1401 = vadd.f32 %v1128, %v1324
      %v1402 = vadd.f32 %v1129, %v1327
      %v1403 = vadd.f32 %v1130, %v1330
      %v1404 = vadd.f32 %v1131, %v1333
      %v1405 = vadd.f32 %v1132, %v1336
      %v1406 = vadd.f32 %v1133, %v1339
      %v1407 = vadd.f32 %v1134, %v1342
      %v1408 = vadd.f32 %v1135, %v1345
      %v1409 = vadd.f32 %v1136, %v1348
      %v1410 = vadd.f32 %v1137, %v1351
      %v1411 = vadd.f32 %v1138, %v1354
      %v1412 = vadd.f32 %v1139, %v1357
      %v1413 = vadd.f32 %v1140, %v1360
      %v1414 = vadd.f32 %v1141, %v1363
      %v1415 = vadd.f32 %v1142, %v1366
      %v1416 = vadd.f32 %v1143, %v1369
      %v1417 = vadd.f32 %v1144, %v1372
      %v1418 = vadd.f32 %v1145, %v1375
      %v1419 = vadd.f32 %v1146, %v1378
      %v1420 = vadd.f32 %v1147, %v1381
      %v1421 = vadd.f32 %v1148, %v1384
      %v1422 = vadd.f32 %v1149, %v1387
      %v1423 = vadd.f32 %v1150, %v1390
      %s1424 = scalar_lea.vmem %s7, 256
      %v1425 = vld [vmem:[%s1424] sm:$0xff]
      %v1426 = vld [vmem:[%s1424 + $0x8] sm:$0xff]
      %v1427 = vld [vmem:[%s1424 + $0x10] sm:$0xff]
      %v1428 = vld [vmem:[%s1424 + $0x18] sm:$0xff]
      %v1429 = vld [vmem:[%s1424 + $0x20] sm:$0xff]
      %v1430 = vld [vmem:[%s1424 + $0x28] sm:$0xff]
      %v1431 = vld [vmem:[%s1424 + $0x30] sm:$0xff]
      %v1432 = vld [vmem:[%s1424 + $0x38] sm:$0xff]
      %v1433 = vld [vmem:[%s1424 + $0x40] sm:$0xff]
      %v1434 = vld [vmem:[%s1424 + $0x48] sm:$0xff]
      %v1435 = vld [vmem:[%s1424 + $0x50] sm:$0xff]
      %v1436 = vld [vmem:[%s1424 + $0x58] sm:$0xff]
      %v1437 = vld [vmem:[%s1424 + $0x60] sm:$0xff]
      %v1438 = vld [vmem:[%s1424 + $0x68] sm:$0xff]
      %v1439 = vld [vmem:[%s1424 + $0x70] sm:$0xff]
      %v1440 = vld [vmem:[%s1424 + $0x78] sm:$0xff]
      %v1441 = vld [vmem:[%s1424 + $0x80] sm:$0xff]
      %v1442 = vld [vmem:[%s1424 + $0x88] sm:$0xff]
      %v1443 = vld [vmem:[%s1424 + $0x90] sm:$0xff]
      %v1444 = vld [vmem:[%s1424 + $0x98] sm:$0xff]
      %v1445 = vld [vmem:[%s1424 + $0xa0] sm:$0xff]
      %v1446 = vld [vmem:[%s1424 + $0xa8] sm:$0xff]
      %v1447 = vld [vmem:[%s1424 + $0xb0] sm:$0xff]
      %v1448 = vld [vmem:[%s1424 + $0xb8] sm:$0xff]
      %v1449 = vld [vmem:[%s1424 + $0xc0] sm:$0xff]
      %v1450 = vld [vmem:[%s1424 + $0xc8] sm:$0xff]
      %v1451 = vld [vmem:[%s1424 + $0xd0] sm:$0xff]
      %v1452 = vld [vmem:[%s1424 + $0xd8] sm:$0xff]
      %v1453 = vld [vmem:[%s1424 + $0xe0] sm:$0xff]
      %v1454 = vld [vmem:[%s1424 + $0xe8] sm:$0xff]
      %v1455 = vld [vmem:[%s1424 + $0xf0] sm:$0xff]
      %v1456 = vld [vmem:[%s1424 + $0xf8] sm:$0xff]
      %1465 = vrot.lane.b32.xlu0 %v1111, 127
      %v1466 = vpop.permute.xlu0 %1465
      %1467 = vrot.lane.b32.xlu0 %v1112, 127
      %v1468 = vpop.permute.xlu0 %1467
      %1469 = vrot.lane.b32.xlu0 %v1113, 127
      %v1470 = vpop.permute.xlu0 %1469
      %1471 = vrot.lane.b32.xlu0 %v1114, 127
      %v1472 = vpop.permute.xlu0 %1471
      %1473 = vrot.lane.b32.xlu0 %v1115, 127
      %v1474 = vpop.permute.xlu0 %1473
      %1475 = vrot.lane.b32.xlu0 %v1116, 127
      %v1476 = vpop.permute.xlu0 %1475
      %1477 = vrot.lane.b32.xlu0 %v1117, 127
      %v1478 = vpop.permute.xlu0 %1477
      %1479 = vrot.lane.b32.xlu0 %v1118, 127
      %v1480 = vpop.permute.xlu0 %1479
      %v1490 = vsel %vm462, %v1425, 0
      %v1493 = vsel %vm462, %v1426, 0
      %v1496 = vsel %vm462, %v1427, 0
      %v1499 = vsel %vm462, %v1428, 0
      %v1502 = vsel %vm462, %v1429, 0
      %v1505 = vsel %vm462, %v1430, 0
      %v1508 = vsel %vm462, %v1431, 0
      %v1511 = vsel %vm462, %v1432, 0
      %v1514 = vsel %vm462, %v1433, 0
      %v1517 = vsel %vm462, %v1434, 0
      %v1520 = vsel %vm462, %v1435, 0
      %v1523 = vsel %vm462, %v1436, 0
      %v1526 = vsel %vm462, %v1437, 0
      %v1529 = vsel %vm462, %v1438, 0
      %v1532 = vsel %vm462, %v1439, 0
      %v1535 = vsel %vm462, %v1440, 0
      %v1538 = vsel %vm462, %v1441, 0
      %v1541 = vsel %vm462, %v1442, 0
      %v1544 = vsel %vm462, %v1443, 0
      %v1547 = vsel %vm462, %v1444, 0
      %v1550 = vsel %vm462, %v1445, 0
      %v1553 = vsel %vm462, %v1446, 0
      %v1556 = vsel %vm462, %v1447, 0
      %v1559 = vsel %vm462, %v1448, 0
      %v1562 = vsel %vm462, %v1449, 0
      %v1565 = vsel %vm462, %v1450, 0
      %v1568 = vsel %vm462, %v1451, 0
      %v1571 = vsel %vm462, %v1452, 0
      %v1574 = vsel %vm462, %v1453, 0
      %v1577 = vsel %vm462, %v1454, 0
      %v1580 = vsel %vm462, %v1455, 0
      %v1583 = vsel %vm462, %v1456, 0
      %1585 = vmatpush.msra.mxu0 0.0
      %1586 = vmatpush.msra.mxu0 0.0
      %1587 = vmatpush.msra.mxu0 0.0
      %1588 = vmatpush.msra.mxu0 0.0
      %1589 = vmatpush.msra.mxu0 0.0
      %1590 = vmatpush.msra.mxu0 0.0
      %1591 = vmatpush.msra.mxu0 0.0
      %1592 = vmatpush.msra.mxu0 0.0
      %1593 = vmatpush.msra.mxu0 %v1480
      %1594 = vmatpush.msra.mxu0 %v1478
      %1595 = vmatpush.msra.mxu0 %v1476
      %1596 = vmatpush.msra.mxu0 %v1474
      %1597 = vmatpush.msra.mxu0 %v1472
      %1598 = vmatpush.msra.mxu0 %v1470
      %1599 = vmatpush.msra.mxu0 %v1468
      %1600 = vmatpush.msra.mxu0 %v1466
      %1601 = vmatmul.f32.gmra.mxu0 %v1490
      %v1602 = vpop.f32.mrf.mxu0
      %v1603 = vadd.f32 0.0, %v1602
      %1604 = vmatmul.f32.gmra.mxu0 %v1493
      %v1605 = vpop.f32.mrf.mxu0
      %v1606 = vadd.f32 0.0, %v1605
      %1607 = vmatmul.f32.gmra.mxu0 %v1496
      %v1608 = vpop.f32.mrf.mxu0
      %v1609 = vadd.f32 0.0, %v1608
      %1610 = vmatmul.f32.gmra.mxu0 %v1499
      %v1611 = vpop.f32.mrf.mxu0
      %v1612 = vadd.f32 0.0, %v1611
      %1613 = vmatmul.f32.gmra.mxu0 %v1502
      %v1614 = vpop.f32.mrf.mxu0
      %v1615 = vadd.f32 0.0, %v1614
      %1616 = vmatmul.f32.gmra.mxu0 %v1505
      %v1617 = vpop.f32.mrf.mxu0
      %v1618 = vadd.f32 0.0, %v1617
      %1619 = vmatmul.f32.gmra.mxu0 %v1508
      %v1620 = vpop.f32.mrf.mxu0
      %v1621 = vadd.f32 0.0, %v1620
      %1622 = vmatmul.f32.gmra.mxu0 %v1511
      %v1623 = vpop.f32.mrf.mxu0
      %v1624 = vadd.f32 0.0, %v1623
      %1625 = vmatmul.f32.gmra.mxu0 %v1514
      %v1626 = vpop.f32.mrf.mxu0
      %v1627 = vadd.f32 0.0, %v1626
      %1628 = vmatmul.f32.gmra.mxu0 %v1517
      %v1629 = vpop.f32.mrf.mxu0
      %v1630 = vadd.f32 0.0, %v1629
      %1631 = vmatmul.f32.gmra.mxu0 %v1520
      %v1632 = vpop.f32.mrf.mxu0
      %v1633 = vadd.f32 0.0, %v1632
      %1634 = vmatmul.f32.gmra.mxu0 %v1523
      %v1635 = vpop.f32.mrf.mxu0
      %v1636 = vadd.f32 0.0, %v1635
      %1637 = vmatmul.f32.gmra.mxu0 %v1526
      %v1638 = vpop.f32.mrf.mxu0
      %v1639 = vadd.f32 0.0, %v1638
      %1640 = vmatmul.f32.gmra.mxu0 %v1529
      %v1641 = vpop.f32.mrf.mxu0
      %v1642 = vadd.f32 0.0, %v1641
      %1643 = vmatmul.f32.gmra.mxu0 %v1532
      %v1644 = vpop.f32.mrf.mxu0
      %v1645 = vadd.f32 0.0, %v1644
      %1646 = vmatmul.f32.gmra.mxu0 %v1535
      %v1647 = vpop.f32.mrf.mxu0
      %v1648 = vadd.f32 0.0, %v1647
      %1649 = vmatmul.f32.gmra.mxu0 %v1538
      %v1650 = vpop.f32.mrf.mxu0
      %v1651 = vadd.f32 0.0, %v1650
      %1652 = vmatmul.f32.gmra.mxu0 %v1541
      %v1653 = vpop.f32.mrf.mxu0
      %v1654 = vadd.f32 0.0, %v1653
      %1655 = vmatmul.f32.gmra.mxu0 %v1544
      %v1656 = vpop.f32.mrf.mxu0
      %v1657 = vadd.f32 0.0, %v1656
      %1658 = vmatmul.f32.gmra.mxu0 %v1547
      %v1659 = vpop.f32.mrf.mxu0
      %v1660 = vadd.f32 0.0, %v1659
      %1661 = vmatmul.f32.gmra.mxu0 %v1550
      %v1662 = vpop.f32.mrf.mxu0
      %v1663 = vadd.f32 0.0, %v1662
      %1664 = vmatmul.f32.gmra.mxu0 %v1553
      %v1665 = vpop.f32.mrf.mxu0
      %v1666 = vadd.f32 0.0, %v1665
      %1667 = vmatmul.f32.gmra.mxu0 %v1556
      %v1668 = vpop.f32.mrf.mxu0
      %v1669 = vadd.f32 0.0, %v1668
      %1670 = vmatmul.f32.gmra.mxu0 %v1559
      %v1671 = vpop.f32.mrf.mxu0
      %v1672 = vadd.f32 0.0, %v1671
      %1673 = vmatmul.f32.gmra.mxu0 %v1562
      %v1674 = vpop.f32.mrf.mxu0
      %v1675 = vadd.f32 0.0, %v1674
      %1676 = vmatmul.f32.gmra.mxu0 %v1565
      %v1677 = vpop.f32.mrf.mxu0
      %v1678 = vadd.f32 0.0, %v1677
      %1679 = vmatmul.f32.gmra.mxu0 %v1568
      %v1680 = vpop.f32.mrf.mxu0
      %v1681 = vadd.f32 0.0, %v1680
      %1682 = vmatmul.f32.gmra.mxu0 %v1571
      %v1683 = vpop.f32.mrf.mxu0
      %v1684 = vadd.f32 0.0, %v1683
      %1685 = vmatmul.f32.gmra.mxu0 %v1574
      %v1686 = vpop.f32.mrf.mxu0
      %v1687 = vadd.f32 0.0, %v1686
      %1688 = vmatmul.f32.gmra.mxu0 %v1577
      %v1689 = vpop.f32.mrf.mxu0
      %v1690 = vadd.f32 0.0, %v1689
      %1691 = vmatmul.f32.gmra.mxu0 %v1580
      %v1692 = vpop.f32.mrf.mxu0
      %v1693 = vadd.f32 0.0, %v1692
      %1694 = vmatmul.f32.gmra.mxu0 %v1583
      %v1695 = vpop.f32.mrf.mxu0
      %v1696 = vadd.f32 0.0, %v1695
      %1697 = vdwg.mxu0
      %v1698 = vadd.f32 %v1392, %v1603
      %v1699 = vadd.f32 %v1393, %v1606
      %v1700 = vadd.f32 %v1394, %v1609
      %v1701 = vadd.f32 %v1395, %v1612
      %v1702 = vadd.f32 %v1396, %v1615
      %v1703 = vadd.f32 %v1397, %v1618
      %v1704 = vadd.f32 %v1398, %v1621
      %v1705 = vadd.f32 %v1399, %v1624
      %v1706 = vadd.f32 %v1400, %v1627
      %v1707 = vadd.f32 %v1401, %v1630
      %v1708 = vadd.f32 %v1402, %v1633
      %v1709 = vadd.f32 %v1403, %v1636
      %v1710 = vadd.f32 %v1404, %v1639
      %v1711 = vadd.f32 %v1405, %v1642
      %v1712 = vadd.f32 %v1406, %v1645
      %v1713 = vadd.f32 %v1407, %v1648
      %v1714 = vadd.f32 %v1408, %v1651
      %v1715 = vadd.f32 %v1409, %v1654
      %v1716 = vadd.f32 %v1410, %v1657
      %v1717 = vadd.f32 %v1411, %v1660
      %v1718 = vadd.f32 %v1412, %v1663
      %v1719 = vadd.f32 %v1413, %v1666
      %v1720 = vadd.f32 %v1414, %v1669
      %v1721 = vadd.f32 %v1415, %v1672
      %v1722 = vadd.f32 %v1416, %v1675
      %v1723 = vadd.f32 %v1417, %v1678
      %v1724 = vadd.f32 %v1418, %v1681
      %v1725 = vadd.f32 %v1419, %v1684
      %v1726 = vadd.f32 %v1420, %v1687
      %v1727 = vadd.f32 %v1421, %v1690
      %v1728 = vadd.f32 %v1422, %v1693
      %v1729 = vadd.f32 %v1423, %v1696
      %s1730 = scalar_lea.vmem %s7, 512
      %v1731 = vld [vmem:[%s1730] sm:$0xff]
      %v1732 = vld [vmem:[%s1730 + $0x8] sm:$0xff]
      %v1733 = vld [vmem:[%s1730 + $0x10] sm:$0xff]
      %v1734 = vld [vmem:[%s1730 + $0x18] sm:$0xff]
      %v1735 = vld [vmem:[%s1730 + $0x20] sm:$0xff]
      %v1736 = vld [vmem:[%s1730 + $0x28] sm:$0xff]
      %v1737 = vld [vmem:[%s1730 + $0x30] sm:$0xff]
      %v1738 = vld [vmem:[%s1730 + $0x38] sm:$0xff]
      %v1739 = vld [vmem:[%s1730 + $0x40] sm:$0xff]
      %v1740 = vld [vmem:[%s1730 + $0x48] sm:$0xff]
      %v1741 = vld [vmem:[%s1730 + $0x50] sm:$0xff]
      %v1742 = vld [vmem:[%s1730 + $0x58] sm:$0xff]
      %v1743 = vld [vmem:[%s1730 + $0x60] sm:$0xff]
      %v1744 = vld [vmem:[%s1730 + $0x68] sm:$0xff]
      %v1745 = vld [vmem:[%s1730 + $0x70] sm:$0xff]
      %v1746 = vld [vmem:[%s1730 + $0x78] sm:$0xff]
      %v1747 = vld [vmem:[%s1730 + $0x80] sm:$0xff]
      %v1748 = vld [vmem:[%s1730 + $0x88] sm:$0xff]
      %v1749 = vld [vmem:[%s1730 + $0x90] sm:$0xff]
      %v1750 = vld [vmem:[%s1730 + $0x98] sm:$0xff]
      %v1751 = vld [vmem:[%s1730 + $0xa0] sm:$0xff]
      %v1752 = vld [vmem:[%s1730 + $0xa8] sm:$0xff]
      %v1753 = vld [vmem:[%s1730 + $0xb0] sm:$0xff]
      %v1754 = vld [vmem:[%s1730 + $0xb8] sm:$0xff]
      %v1755 = vld [vmem:[%s1730 + $0xc0] sm:$0xff]
      %v1756 = vld [vmem:[%s1730 + $0xc8] sm:$0xff]
      %v1757 = vld [vmem:[%s1730 + $0xd0] sm:$0xff]
      %v1758 = vld [vmem:[%s1730 + $0xd8] sm:$0xff]
      %v1759 = vld [vmem:[%s1730 + $0xe0] sm:$0xff]
      %v1760 = vld [vmem:[%s1730 + $0xe8] sm:$0xff]
      %v1761 = vld [vmem:[%s1730 + $0xf0] sm:$0xff]
      %v1762 = vld [vmem:[%s1730 + $0xf8] sm:$0xff]
      %1763 = vrot.lane.b32.xlu0 %v1111, 126
      %v1764 = vpop.permute.xlu0 %1763
      %1765 = vrot.lane.b32.xlu0 %v1112, 126
      %v1766 = vpop.permute.xlu0 %1765
      %1767 = vrot.lane.b32.xlu0 %v1113, 126
      %v1768 = vpop.permute.xlu0 %1767
      %1769 = vrot.lane.b32.xlu0 %v1114, 126
      %v1770 = vpop.permute.xlu0 %1769
      %1771 = vrot.lane.b32.xlu0 %v1115, 126
      %v1772 = vpop.permute.xlu0 %1771
      %1773 = vrot.lane.b32.xlu0 %v1116, 126
      %v1774 = vpop.permute.xlu0 %1773
      %1775 = vrot.lane.b32.xlu0 %v1117, 126
      %v1776 = vpop.permute.xlu0 %1775
      %1777 = vrot.lane.b32.xlu0 %v1118, 126
      %v1778 = vpop.permute.xlu0 %1777
      %v1788 = vsel %vm462, %v1731, 0
      %v1791 = vsel %vm462, %v1732, 0
      %v1794 = vsel %vm462, %v1733, 0
      %v1797 = vsel %vm462, %v1734, 0
      %v1800 = vsel %vm462, %v1735, 0
      %v1803 = vsel %vm462, %v1736, 0
      %v1806 = vsel %vm462, %v1737, 0
      %v1809 = vsel %vm462, %v1738, 0
      %v1812 = vsel %vm462, %v1739, 0
      %v1815 = vsel %vm462, %v1740, 0
      %v1818 = vsel %vm462, %v1741, 0
      %v1821 = vsel %vm462, %v1742, 0
      %v1824 = vsel %vm462, %v1743, 0
      %v1827 = vsel %vm462, %v1744, 0
      %v1830 = vsel %vm462, %v1745, 0
      %v1833 = vsel %vm462, %v1746, 0
      %v1836 = vsel %vm462, %v1747, 0
      %v1839 = vsel %vm462, %v1748, 0
      %v1842 = vsel %vm462, %v1749, 0
      %v1845 = vsel %vm462, %v1750, 0
      %v1848 = vsel %vm462, %v1751, 0
      %v1851 = vsel %vm462, %v1752, 0
      %v1854 = vsel %vm462, %v1753, 0
      %v1857 = vsel %vm462, %v1754, 0
      %v1860 = vsel %vm462, %v1755, 0
      %v1863 = vsel %vm462, %v1756, 0
      %v1866 = vsel %vm462, %v1757, 0
      %v1869 = vsel %vm462, %v1758, 0
      %v1872 = vsel %vm462, %v1759, 0
      %v1875 = vsel %vm462, %v1760, 0
      %v1878 = vsel %vm462, %v1761, 0
      %v1881 = vsel %vm462, %v1762, 0
      %1883 = vmatpush.msra.mxu0 0.0
      %1884 = vmatpush.msra.mxu0 0.0
      %1885 = vmatpush.msra.mxu0 0.0
      %1886 = vmatpush.msra.mxu0 0.0
      %1887 = vmatpush.msra.mxu0 0.0
      %1888 = vmatpush.msra.mxu0 0.0
      %1889 = vmatpush.msra.mxu0 0.0
      %1890 = vmatpush.msra.mxu0 0.0
      %1891 = vmatpush.msra.mxu0 %v1778
      %1892 = vmatpush.msra.mxu0 %v1776
      %1893 = vmatpush.msra.mxu0 %v1774
      %1894 = vmatpush.msra.mxu0 %v1772
      %1895 = vmatpush.msra.mxu0 %v1770
      %1896 = vmatpush.msra.mxu0 %v1768
      %1897 = vmatpush.msra.mxu0 %v1766
      %1898 = vmatpush.msra.mxu0 %v1764
      %1899 = vmatmul.f32.gmra.mxu0 %v1788
      %v1900 = vpop.f32.mrf.mxu0
      %v1901 = vadd.f32 0.0, %v1900
      %1902 = vmatmul.f32.gmra.mxu0 %v1791
      %v1903 = vpop.f32.mrf.mxu0
      %v1904 = vadd.f32 0.0, %v1903
      %1905 = vmatmul.f32.gmra.mxu0 %v1794
      %v1906 = vpop.f32.mrf.mxu0
      %v1907 = vadd.f32 0.0, %v1906
      %1908 = vmatmul.f32.gmra.mxu0 %v1797
      %v1909 = vpop.f32.mrf.mxu0
      %v1910 = vadd.f32 0.0, %v1909
      %1911 = vmatmul.f32.gmra.mxu0 %v1800
      %v1912 = vpop.f32.mrf.mxu0
      %v1913 = vadd.f32 0.0, %v1912
      %1914 = vmatmul.f32.gmra.mxu0 %v1803
      %v1915 = vpop.f32.mrf.mxu0
      %v1916 = vadd.f32 0.0, %v1915
      %1917 = vmatmul.f32.gmra.mxu0 %v1806
      %v1918 = vpop.f32.mrf.mxu0
      %v1919 = vadd.f32 0.0, %v1918
      %1920 = vmatmul.f32.gmra.mxu0 %v1809
      %v1921 = vpop.f32.mrf.mxu0
      %v1922 = vadd.f32 0.0, %v1921
      %1923 = vmatmul.f32.gmra.mxu0 %v1812
      %v1924 = vpop.f32.mrf.mxu0
      %v1925 = vadd.f32 0.0, %v1924
      %1926 = vmatmul.f32.gmra.mxu0 %v1815
      %v1927 = vpop.f32.mrf.mxu0
      %v1928 = vadd.f32 0.0, %v1927
      %1929 = vmatmul.f32.gmra.mxu0 %v1818
      %v1930 = vpop.f32.mrf.mxu0
      %v1931 = vadd.f32 0.0, %v1930
      %1932 = vmatmul.f32.gmra.mxu0 %v1821
      %v1933 = vpop.f32.mrf.mxu0
      %v1934 = vadd.f32 0.0, %v1933
      %1935 = vmatmul.f32.gmra.mxu0 %v1824
      %v1936 = vpop.f32.mrf.mxu0
      %v1937 = vadd.f32 0.0, %v1936
      %1938 = vmatmul.f32.gmra.mxu0 %v1827
      %v1939 = vpop.f32.mrf.mxu0
      %v1940 = vadd.f32 0.0, %v1939
      %1941 = vmatmul.f32.gmra.mxu0 %v1830
      %v1942 = vpop.f32.mrf.mxu0
      %v1943 = vadd.f32 0.0, %v1942
      %1944 = vmatmul.f32.gmra.mxu0 %v1833
      %v1945 = vpop.f32.mrf.mxu0
      %v1946 = vadd.f32 0.0, %v1945
      %1947 = vmatmul.f32.gmra.mxu0 %v1836
      %v1948 = vpop.f32.mrf.mxu0
      %v1949 = vadd.f32 0.0, %v1948
      %1950 = vmatmul.f32.gmra.mxu0 %v1839
      %v1951 = vpop.f32.mrf.mxu0
      %v1952 = vadd.f32 0.0, %v1951
      %1953 = vmatmul.f32.gmra.mxu0 %v1842
      %v1954 = vpop.f32.mrf.mxu0
      %v1955 = vadd.f32 0.0, %v1954
      %1956 = vmatmul.f32.gmra.mxu0 %v1845
      %v1957 = vpop.f32.mrf.mxu0
      %v1958 = vadd.f32 0.0, %v1957
      %1959 = vmatmul.f32.gmra.mxu0 %v1848
      %v1960 = vpop.f32.mrf.mxu0
      %v1961 = vadd.f32 0.0, %v1960
      %1962 = vmatmul.f32.gmra.mxu0 %v1851
      %v1963 = vpop.f32.mrf.mxu0
      %v1964 = vadd.f32 0.0, %v1963
      %1965 = vmatmul.f32.gmra.mxu0 %v1854
      %v1966 = vpop.f32.mrf.mxu0
      %v1967 = vadd.f32 0.0, %v1966
      %1968 = vmatmul.f32.gmra.mxu0 %v1857
      %v1969 = vpop.f32.mrf.mxu0
      %v1970 = vadd.f32 0.0, %v1969
      %1971 = vmatmul.f32.gmra.mxu0 %v1860
      %v1972 = vpop.f32.mrf.mxu0
      %v1973 = vadd.f32 0.0, %v1972
      %1974 = vmatmul.f32.gmra.mxu0 %v1863
      %v1975 = vpop.f32.mrf.mxu0
      %v1976 = vadd.f32 0.0, %v1975
      %1977 = vmatmul.f32.gmra.mxu0 %v1866
      %v1978 = vpop.f32.mrf.mxu0
      %v1979 = vadd.f32 0.0, %v1978
      %1980 = vmatmul.f32.gmra.mxu0 %v1869
      %v1981 = vpop.f32.mrf.mxu0
      %v1982 = vadd.f32 0.0, %v1981
      %1983 = vmatmul.f32.gmra.mxu0 %v1872
      %v1984 = vpop.f32.mrf.mxu0
      %v1985 = vadd.f32 0.0, %v1984
      %1986 = vmatmul.f32.gmra.mxu0 %v1875
      %v1987 = vpop.f32.mrf.mxu0
      %v1988 = vadd.f32 0.0, %v1987
      %1989 = vmatmul.f32.gmra.mxu0 %v1878
      %v1990 = vpop.f32.mrf.mxu0
      %v1991 = vadd.f32 0.0, %v1990
      %1992 = vmatmul.f32.gmra.mxu0 %v1881
      %v1993 = vpop.f32.mrf.mxu0
      %v1994 = vadd.f32 0.0, %v1993
      %1995 = vdwg.mxu0
      %v1996 = vadd.f32 %v1698, %v1901
      %v1997 = vadd.f32 %v1699, %v1904
      %v1998 = vadd.f32 %v1700, %v1907
      %v1999 = vadd.f32 %v1701, %v1910
      %v2000 = vadd.f32 %v1702, %v1913
      %v2001 = vadd.f32 %v1703, %v1916
      %v2002 = vadd.f32 %v1704, %v1919
      %v2003 = vadd.f32 %v1705, %v1922
      %v2004 = vadd.f32 %v1706, %v1925
      %v2005 = vadd.f32 %v1707, %v1928
      %v2006 = vadd.f32 %v1708, %v1931
      %v2007 = vadd.f32 %v1709, %v1934
      %v2008 = vadd.f32 %v1710, %v1937
      %v2009 = vadd.f32 %v1711, %v1940
      %v2010 = vadd.f32 %v1712, %v1943
      %v2011 = vadd.f32 %v1713, %v1946
      %v2012 = vadd.f32 %v1714, %v1949
      %v2013 = vadd.f32 %v1715, %v1952
      %v2014 = vadd.f32 %v1716, %v1955
      %v2015 = vadd.f32 %v1717, %v1958
      %v2016 = vadd.f32 %v1718, %v1961
      %v2017 = vadd.f32 %v1719, %v1964
      %v2018 = vadd.f32 %v1720, %v1967
      %v2019 = vadd.f32 %v1721, %v1970
      %v2020 = vadd.f32 %v1722, %v1973
      %v2021 = vadd.f32 %v1723, %v1976
      %v2022 = vadd.f32 %v1724, %v1979
      %v2023 = vadd.f32 %v1725, %v1982
      %v2024 = vadd.f32 %v1726, %v1985
      %v2025 = vadd.f32 %v1727, %v1988
      %v2026 = vadd.f32 %v1728, %v1991
      %v2027 = vadd.f32 %v1729, %v1994
      %v2028 = vtanh.pop %v1996
      %v2029 = vtanh.pop %v1997
      %v2030 = vtanh.pop %v1998
      %v2031 = vtanh.pop %v1999
      %v2032 = vtanh.pop %v2000
      %v2033 = vtanh.pop %v2001
      %v2034 = vtanh.pop %v2002
      %v2035 = vtanh.pop %v2003
      %v2036 = vtanh.pop %v2004
      %v2037 = vtanh.pop %v2005
      %v2038 = vtanh.pop %v2006
      %v2039 = vtanh.pop %v2007
      %v2040 = vtanh.pop %v2008
      %v2041 = vtanh.pop %v2009
      %v2042 = vtanh.pop %v2010
      %v2043 = vtanh.pop %v2011
      %v2044 = vtanh.pop %v2012
      %v2045 = vtanh.pop %v2013
      %v2046 = vtanh.pop %v2014
      %v2047 = vtanh.pop %v2015
      %v2048 = vtanh.pop %v2016
      %v2049 = vtanh.pop %v2017
      %v2050 = vtanh.pop %v2018
      %v2051 = vtanh.pop %v2019
      %v2052 = vtanh.pop %v2020
      %v2053 = vtanh.pop %v2021
      %v2054 = vtanh.pop %v2022
      %v2055 = vtanh.pop %v2023
      %v2056 = vtanh.pop %v2024
      %v2057 = vtanh.pop %v2025
      %v2058 = vtanh.pop %v2026
      %v2059 = vtanh.pop %v2027
      %v2060 = vmul.f32 %v2028, 0.1
      %v2061 = vmul.f32 %v2029, 0.1
      %v2062 = vmul.f32 %v2030, 0.1
      %v2063 = vmul.f32 %v2031, 0.1
      %v2064 = vmul.f32 %v2032, 0.1
      %v2065 = vmul.f32 %v2033, 0.1
      %v2066 = vmul.f32 %v2034, 0.1
      %v2067 = vmul.f32 %v2035, 0.1
      %v2068 = vmul.f32 %v2036, 0.1
      %v2069 = vmul.f32 %v2037, 0.1
      %v2070 = vmul.f32 %v2038, 0.1
      %v2071 = vmul.f32 %v2039, 0.1
      %v2072 = vmul.f32 %v2040, 0.1
      %v2073 = vmul.f32 %v2041, 0.1
      %v2074 = vmul.f32 %v2042, 0.1
      %v2075 = vmul.f32 %v2043, 0.1
      %v2076 = vmul.f32 %v2044, 0.1
      %v2077 = vmul.f32 %v2045, 0.1
      %v2078 = vmul.f32 %v2046, 0.1
      %v2079 = vmul.f32 %v2047, 0.1
      %v2080 = vmul.f32 %v2048, 0.1
      %v2081 = vmul.f32 %v2049, 0.1
      %v2082 = vmul.f32 %v2050, 0.1
      %v2083 = vmul.f32 %v2051, 0.1
      %v2084 = vmul.f32 %v2052, 0.1
      %v2085 = vmul.f32 %v2053, 0.1
      %v2086 = vmul.f32 %v2054, 0.1
      %v2087 = vmul.f32 %v2055, 0.1
      %v2088 = vmul.f32 %v2056, 0.1
      %v2089 = vmul.f32 %v2057, 0.1
      %v2090 = vmul.f32 %v2058, 0.1
      %v2091 = vmul.f32 %v2059, 0.1
      %vm2092 = vcmask 7168
      %2093 = vst.msk [vmem:[%s346] sm:$0xff] %vm2092, %v2060
      %2094 = vst.msk [vmem:[%s346 + $0x8] sm:$0xff] %vm2092, %v2061
      %2095 = vst.msk [vmem:[%s346 + $0x10] sm:$0xff] %vm2092, %v2062
      %2096 = vst.msk [vmem:[%s346 + $0x18] sm:$0xff] %vm2092, %v2063
      %2097 = vst.msk [vmem:[%s346 + $0x20] sm:$0xff] %vm2092, %v2064
      %2098 = vst.msk [vmem:[%s346 + $0x28] sm:$0xff] %vm2092, %v2065
      %2099 = vst.msk [vmem:[%s346 + $0x30] sm:$0xff] %vm2092, %v2066
      %2100 = vst.msk [vmem:[%s346 + $0x38] sm:$0xff] %vm2092, %v2067
      %2101 = vst.msk [vmem:[%s346 + $0x40] sm:$0xff] %vm2092, %v2068
      %2102 = vst.msk [vmem:[%s346 + $0x48] sm:$0xff] %vm2092, %v2069
      %2103 = vst.msk [vmem:[%s346 + $0x50] sm:$0xff] %vm2092, %v2070
      %2104 = vst.msk [vmem:[%s346 + $0x58] sm:$0xff] %vm2092, %v2071
      %2105 = vst.msk [vmem:[%s346 + $0x60] sm:$0xff] %vm2092, %v2072
      %2106 = vst.msk [vmem:[%s346 + $0x68] sm:$0xff] %vm2092, %v2073
      %2107 = vst.msk [vmem:[%s346 + $0x70] sm:$0xff] %vm2092, %v2074
      %2108 = vst.msk [vmem:[%s346 + $0x78] sm:$0xff] %vm2092, %v2075
      %2109 = vst.msk [vmem:[%s346 + $0x80] sm:$0xff] %vm2092, %v2076
      %2110 = vst.msk [vmem:[%s346 + $0x88] sm:$0xff] %vm2092, %v2077
      %2111 = vst.msk [vmem:[%s346 + $0x90] sm:$0xff] %vm2092, %v2078
      %2112 = vst.msk [vmem:[%s346 + $0x98] sm:$0xff] %vm2092, %v2079
      %2113 = vst.msk [vmem:[%s346 + $0xa0] sm:$0xff] %vm2092, %v2080
      %2114 = vst.msk [vmem:[%s346 + $0xa8] sm:$0xff] %vm2092, %v2081
      %2115 = vst.msk [vmem:[%s346 + $0xb0] sm:$0xff] %vm2092, %v2082
      %2116 = vst.msk [vmem:[%s346 + $0xb8] sm:$0xff] %vm2092, %v2083
      %2117 = vst.msk [vmem:[%s346 + $0xc0] sm:$0xff] %vm2092, %v2084
      %2118 = vst.msk [vmem:[%s346 + $0xc8] sm:$0xff] %vm2092, %v2085
      %2119 = vst.msk [vmem:[%s346 + $0xd0] sm:$0xff] %vm2092, %v2086
      %2120 = vst.msk [vmem:[%s346 + $0xd8] sm:$0xff] %vm2092, %v2087
      %2121 = vst.msk [vmem:[%s346 + $0xe0] sm:$0xff] %vm2092, %v2088
      %2122 = vst.msk [vmem:[%s346 + $0xe8] sm:$0xff] %vm2092, %v2089
      %2123 = vst.msk [vmem:[%s346 + $0xf0] sm:$0xff] %vm2092, %v2090
      %2124 = vst.msk [vmem:[%s346 + $0xf8] sm:$0xff] %vm2092, %v2091
      %p2125 = scmp.lt.s32.totalorder %s20, 1
      %s2126 = scalar_select %p2125, %s20, 1
      %s2127 = smul.addr %s2126, 32
      %s2128 = smul.addr %s2127, 8
      %s2129 = scalar_lea.vmem %s9, %s2128
      // Predicated region
      $region57: #{deform_gcn_forward.1} parent=55 // pred_check
        %p2130 = pneg %p237
      $region58: #{deform_gcn_forward.1} parent=55 // pred_check_branch
        %2132 = sbr.rel (%p2130) target = $region60
      $region59: #{deform_gcn_forward.1} parent=55 // pred_region
        _
      $region60: #{deform_gcn_forward.1} parent=55 // pred_fallthru
        _
    $region56: #{deform_gcn_forward.1} parent=5 // pred_fallthru
      _
    %p2133 = scmp.le.s32.totalorder 2, %s15
    // Predicated region
    $region61: #{deform_gcn_forward.1} parent=5 // pred_check
      %p2134 = pneg %p2133
    $region62: #{deform_gcn_forward.1} parent=5 // pred_check_branch
      %2136 = sbr.rel (%p2134) target = $region64
    $region63: #{deform_gcn_forward.1} parent=5 // pred_region
      %s2137 = ssub.s32 %s15, 2
      // Predicated region
      $region65: #{deform_gcn_forward.1} parent=63 // pred_check
        %p2138 = pneg %p243
      $region66: #{deform_gcn_forward.1} parent=63 // pred_check_branch
        %2140 = sbr.rel (%p2138) target = $region68
      $region67: #{deform_gcn_forward.1} parent=63 // pred_region
        %p2141 = scmp.lt.s32.totalorder %s21, 1
        %s2142 = scalar_select %p2141, %s21, 1
        %s2143 = smul.addr %s2142, 32
        %s2144 = smul.addr %s2143, 8
        %s2145 = scalar_lea.vmem %s9, %s2144
      $region68: #{deform_gcn_forward.1} parent=63 // pred_fallthru
        _
    $region64: #{deform_gcn_forward.1} parent=5 // pred_fallthru
      _
  $region6: #{deform_gcn_forward.1} parent=0 // loop_footer
    %s19 = sadd.s32 1, %s15
  $region7: #{deform_gcn_forward.1} parent=0 // loop_footer_branch
    %14 = sbr.rel target = $region3
  $region8: #{deform_gcn_forward.1} parent=0 // loop_exit
    _

</llo_original>
